<compile_context>
chip_gen: v5e
topology: v5e:2x2
jax: 0.10.0
libtpu: 0.0.40
codegen_flags: <defaults>
</compile_context>

<pallas_src>
import functools

import jax
import jax.numpy as jnp
from jax.experimental import pallas as pl
from jax.experimental.pallas import tpu as pltpu


def _round_up(v, m):
    return ((v + m - 1) // m) * m


# ----------------------------- Pallas kernel -------------------------------


def sage_layer_kernel(a_ref, xsrc_ref, xtgt_ref, invdeg_ref, wl_ref, wr_ref, b_ref,
                      o_ref, acc_ref, *, c_out, apply_relu, apply_log_softmax):
    """One SAGEConv layer, tiled over (target-row tile i, source K-tile k).

    a_ref      : [tgt_tile, src_tile]   bf16 *edge-count* adjacency block (exact integers)
    xsrc_ref   : [src_tile, c_in_pad]   bf16 source-node feature block (k-th K tile)
    xtgt_ref   : [tgt_tile, c_in_pad]   bf16 target (prefix) feature block (i-th row tile)
    invdeg_ref : [tgt_tile, 1]          f32 exact 1/deg per target row
    wl_ref     : [c_in_pad, c_out_pad]  bf16 lin_l weight (transposed, zero-padded)
    wr_ref     : [c_in_pad, c_out_pad]  bf16 lin_r weight (transposed, zero-padded)
    b_ref      : [1, c_out_pad]         f32 bias (zero-padded)
    o_ref      : [tgt_tile, c_out_pad]  bf16 (intermediate layer) / f32 (last layer) output
    acc_ref    : [tgt_tile, c_in_pad]   f32 VMEM accumulator for sum_k A_k @ x_k
    """
    k = pl.program_id(1)

    @pl.when(k == 0)
    def _init():
        acc_ref[...] = jnp.zeros_like(acc_ref)

    # Unnormalized neighbor sum on the MXU (exact counts, f32 accumulation).
    acc_ref[...] += jnp.dot(a_ref[...], xsrc_ref[...],
                            preferred_element_type=jnp.float32)

    @pl.when(k == pl.num_programs(1) - 1)
    def _finish():
        # Project the aggregate, then apply the exact f32 mean normalization
        # (row scaling commutes with the right-matmul by Wl).
        agg = jnp.dot(acc_ref[...].astype(jnp.bfloat16), wl_ref[...],
                      preferred_element_type=jnp.float32)
        h = agg * invdeg_ref[...]
        h = h + jnp.dot(xtgt_ref[...], wr_ref[...],
                        preferred_element_type=jnp.float32)
        h = h + b_ref[...]
        if apply_relu:
            h = jnp.maximum(h, 0.0)
        if apply_log_softmax:
            # Output lanes >= c_out are padding: mask them out of the reduction.
            col = jax.lax.broadcasted_iota(jnp.int32, h.shape, 1)
            h = jnp.where(col < c_out, h, -1e30)
            m = jnp.max(h, axis=-1, keepdims=True)
            shifted = h - m
            lse = jnp.log(jnp.sum(jnp.exp(shifted), axis=-1, keepdims=True))
            h = shifted - lse
        o_ref[...] = h.astype(o_ref.dtype)


def sage_layer(x_pad, edge_index, size, wl_p, wr_p, b_p, c_out, *,
               apply_relu, apply_log_softmax, tgt_tile=512, src_tile=2048):
    """Run one fused SAGEConv layer.  `x_pad` is bf16, lane-dense (c_in_pad columns).

    Returns the *padded* bf16 output for intermediate layers (fed directly to the next
    layer) or the padded f32 log-softmax output for the last layer.
    """
    n_src, n_tgt = size
    c_in_pad, c_out_pad = wl_p.shape
    assert n_tgt <= n_src and x_pad.shape[1] == c_in_pad

    # ---- tile selection -----------------------------------------------------
    tgt_rows = _round_up(n_tgt, 32)
    tgt_tile = min(tgt_tile, tgt_rows)
    # Guarantee >=2 target-row tiles whenever possible so the "parallel" axis can
    # shard across both TensorCores on v7x.
    if tgt_rows > 32 and tgt_rows // tgt_tile < 2:
        tgt_tile = _round_up(-(-tgt_rows // 2), 32)
    n_tgt_pad = _round_up(tgt_rows, tgt_tile)

    src_tile = min(src_tile, _round_up(n_src, 128))
    n_src_pad = _round_up(n_src, src_tile)
    n_rows_pad = max(n_src_pad, n_tgt_pad)

    # ---- activations: already bf16 + lane-dense; only adjust the row count ---
    rows = x_pad.shape[0]
    if rows < n_rows_pad:
        x_pad = jnp.pad(x_pad, ((0, n_rows_pad - rows), (0, 0)))
    elif rows > n_rows_pad:
        x_pad = x_pad[:n_rows_pad]

    # ---- adjacency as exact bf16 edge counts + exact f32 inverse degree ------
    src = edge_index[0]
    dst = edge_index[1]
    counts = jnp.zeros((n_tgt_pad, n_src_pad), jnp.float32).at[dst, src].add(1.0)
    deg = jnp.sum(counts, axis=1, keepdims=True)
    inv_deg = 1.0 / jnp.maximum(deg, 1.0)          # isolated targets -> 0 aggregate anyway
    a_counts = counts.astype(jnp.bfloat16)          # small integer counts: exact in bf16

    out_dtype = jnp.float32 if apply_log_softmax else jnp.bfloat16
    grid = (n_tgt_pad // tgt_tile, n_src_pad // src_tile)

    kernel = functools.partial(
        sage_layer_kernel,
        c_out=c_out,
        apply_relu=apply_relu,
        apply_log_softmax=apply_log_softmax,
    )

    out = pl.pallas_call(
        kernel,
        out_shape=jax.ShapeDtypeStruct((n_tgt_pad, c_out_pad), out_dtype),
        grid_spec=pltpu.PrefetchScalarGridSpec(
            num_scalar_prefetch=0,
            grid=grid,
            in_specs=[
                pl.BlockSpec((tgt_tile, src_tile), lambda i, k: (i, k)),    # A edge counts
                pl.BlockSpec((src_tile, c_in_pad), lambda i, k: (k, 0)),    # x as source
                pl.BlockSpec((tgt_tile, c_in_pad), lambda i, k: (i, 0)),    # x prefix (target)
                pl.BlockSpec((tgt_tile, 1), lambda i, k: (i, 0)),           # 1/deg (f32)
                pl.BlockSpec((c_in_pad, c_out_pad), lambda i, k: (0, 0)),   # Wl
                pl.BlockSpec((c_in_pad, c_out_pad), lambda i, k: (0, 0)),   # Wr
                pl.BlockSpec((1, c_out_pad), lambda i, k: (0, 0)),          # bias
            ],
            out_specs=pl.BlockSpec((tgt_tile, c_out_pad), lambda i, k: (i, 0)),
            scratch_shapes=[pltpu.VMEM((tgt_tile, c_in_pad), jnp.float32)],
        ),
        compiler_params=pltpu.CompilerParams(
            dimension_semantics=("parallel", "arbitrary"),
            vmem_limit_bytes=32 * 1024 * 1024,   # fits v7x's 64 MiB physical VMEM too
        ),
    )(a_counts, x_pad, x_pad, inv_deg, wl_p, wr_p, b_p)   # x_pad twice: source + target prefix

    return out


# ------------------------------- SAGE model ---------------------------------


def init_sage_params(key, in_channels, hidden_channels, out_channels, num_layers):
    """Deterministic Glorot-uniform init for each SAGEConv (lin_l^T, lin_r^T, bias), f32."""
    dims = [in_channels] + [hidden_channels] * (num_layers - 1)
    outs = [hidden_channels] * (num_layers - 1) + [out_channels]
    params = []
    for c_in, c_out in zip(dims, outs):
        key, k1, k2 = jax.random.split(key, 3)
        bound = jnp.sqrt(6.0 / (c_in + c_out))
        wl_t = jax.random.uniform(k1, (c_in, c_out), jnp.float32, -bound, bound)
        wr_t = jax.random.uniform(k2, (c_in, c_out), jnp.float32, -bound, bound)
        bias = jnp.zeros((c_out,), jnp.float32)
        params.append((wl_t, wr_t, bias))
    return params


def pad_sage_params(params):
    """Pad weights/bias to lane-dense (128-multiple) shapes ONCE, cast weights to bf16."""
    padded = []
    for wl_t, wr_t, bias in params:
        c_in, c_out = wl_t.shape
        c_in_pad = _round_up(c_in, 128)
        c_out_pad = _round_up(c_out, 128)
        wl_p = jnp.zeros((c_in_pad, c_out_pad), jnp.bfloat16).at[:c_in, :c_out].set(
            wl_t.astype(jnp.bfloat16))
        wr_p = jnp.zeros((c_in_pad, c_out_pad), jnp.bfloat16).at[:c_in, :c_out].set(
            wr_t.astype(jnp.bfloat16))
        b_p = jnp.zeros((1, c_out_pad), jnp.float32).at[0, :c_out].set(
            bias.astype(jnp.float32))
        padded.append((wl_p, wr_p, b_p, c_out))
    return padded


def sage_forward(padded_params, x, adjs):
    """adjs: list of (edge_index [2, E], size (n_src, n_tgt)), one per layer."""
    num_layers = len(padded_params)
    # One-time lane-dense bf16 padding of the input features (c_in=100 -> 128).
    c_in0_pad = padded_params[0][0].shape[0]
    x_pad = jnp.zeros((x.shape[0], c_in0_pad), jnp.bfloat16).at[:, :x.shape[1]].set(
        x.astype(jnp.bfloat16))

    for i, (edge_index, size) in enumerate(adjs):
        wl_p, wr_p, b_p, c_out = padded_params[i]
        last = (i == num_layers - 1)
        # Intermediate layers stay padded bf16 and flow straight into the next layer;
        # zero pad lanes/rows are inert (zero W rows, zero A columns).
        x_pad = sage_layer(x_pad, edge_index, size, wl_p, wr_p, b_p, c_out,
                           apply_relu=not last, apply_log_softmax=last)

    n_tgt_last = adjs[-1][1][1]
    c_out_last = padded_params[-1][3]
    return x_pad[:n_tgt_last, :c_out_last]


# ------------------------------ reference -----------------------------------


def build_mean_adjacency(edge_index, size):
    """Dense row-normalized adjacency A[t, s] for mean aggregation over edges s->t."""
    n_src, n_tgt = size
    src = edge_index[0]
    dst = edge_index[1]
    a = jnp.zeros((n_tgt, n_src), jnp.float32).at[dst, src].add(1.0)
    deg = jnp.sum(a, axis=1, keepdims=True)
    return a / jnp.maximum(deg, 1.0)


def sage_forward_ref(params, x, adjs):
    """Pure-JAX f32 reference of the same forward pass (for a tolerance check)."""
    num_layers = len(params)
    for i, (edge_index, size) in enumerate(adjs):
        wl_t, wr_t, b = params[i]
        n_src, n_tgt = size
        a = build_mean_adjacency(edge_index, size)
        h = a @ x[:n_src] @ wl_t + x[:n_tgt] @ wr_t + b
        if i != num_layers - 1:
            h = jnp.maximum(h, 0.0)
        x = h
    return jax.nn.log_softmax(x, axis=-1)


# --------------------------------- main --------------------------------------


if __name__ == "__main__":
    key = jax.random.PRNGKey(0)

    # ogb-products-like hyperparams at toy node counts.
    in_channels, hidden_channels, out_channels, num_layers = 100, 256, 47, 3

    # Synthetic NeighborSampler bipartite blocks: target nodes are a prefix of sources.
    layer_sizes = [(600, 300), (300, 120), (120, 48)]
    edges_per_layer = [3000, 1500, 600]

    key, kx = jax.random.split(key)
    x = jax.random.normal(kx, (layer_sizes[0][0], in_channels), jnp.float32)

    adjs = []
    for (n_src, n_tgt), n_edges in zip(layer_sizes, edges_per_layer):
        key, ks, kd = jax.random.split(key, 3)
        src = jax.random.randint(ks, (n_edges,), 0, n_src, jnp.int32)
        dst = jax.random.randint(kd, (n_edges,), 0, n_tgt, jnp.int32)
        adjs.append((jnp.stack([src, dst]), (n_src, n_tgt)))

    key, kp = jax.random.split(key)
    params = init_sage_params(kp, in_channels, hidden_channels, out_channels,
                              num_layers)
    padded_params = pad_sage_params(params)   # padded once, reused for every forward call

    out = jax.block_until_ready(sage_forward(padded_params, x, adjs))
    ref = jax.block_until_ready(sage_forward_ref(params, x, adjs))

    assert out.shape == (layer_sizes[-1][1], out_channels)
    # log_softmax rows should sum (in prob space) to ~1.
    assert jnp.allclose(jnp.sum(jnp.exp(out), axis=-1), 1.0, atol=1e-3)
    # bf16 MXU inputs / bf16 inter-layer activations vs f32 reference: loose tolerance.
    max_diff = float(jnp.max(jnp.abs(out - ref)))
    assert max_diff < 0.25, f"max |out - ref| = {max_diff}"
    print("KERNEL_OK")
</pallas_src>

<mosaic_0001>
module attributes {stable_mosaic.version = 11 : i64} {
  func.func @sage_layer_kernel(%arg0: i32, %arg1: i32, %arg2: memref<160x640xbf16, #tpu.memory_space<vmem>>, %arg3: memref<640x128xbf16, #tpu.memory_space<vmem>>, %arg4: memref<160x128xbf16, #tpu.memory_space<vmem>>, %arg5: memref<160x1xf32, #tpu.memory_space<vmem>>, %arg6: memref<128x256xbf16, #tpu.memory_space<vmem>>, %arg7: memref<128x256xbf16, #tpu.memory_space<vmem>>, %arg8: memref<1x256xf32, #tpu.memory_space<vmem>>, %arg9: memref<160x256xbf16, #tpu.memory_space<vmem>>, %arg10: memref<160x128xf32, #tpu.memory_space<vmem>>) attributes {dimension_semantics = [#tpu.dimension_semantics<parallel>, #tpu.dimension_semantics<arbitrary>], iteration_bounds = array<i64: 2, 1>, scalar_prefetch = 0 : i64, scratch_operands = 1 : i64, tpu.core_type = #tpu.core_type<tc>, window_params = [{transform_indices = @transform_0, window_bounds = array<i64: 160, 640>}, {transform_indices = @transform_1, window_bounds = array<i64: 640, 128>}, {transform_indices = @transform_2, window_bounds = array<i64: 160, 128>}, {transform_indices = @transform_3, window_bounds = array<i64: 160, 1>}, {pipeline_mode = #tpu.pipeline_mode<synchronous>, transform_indices = @transform_4, window_bounds = array<i64: 128, 256>}, {pipeline_mode = #tpu.pipeline_mode<synchronous>, transform_indices = @transform_5, window_bounds = array<i64: 128, 256>}, {pipeline_mode = #tpu.pipeline_mode<synchronous>, transform_indices = @transform_6, window_bounds = array<i64: 1, 256>}, {transform_indices = @transform_7, window_bounds = array<i64: 160, 256>}]} {
    %c0_i32 = arith.constant 0 : i32
    %0 = arith.cmpi eq, %arg1, %c0_i32 : i32
    %1 = arith.extui %0 : i1 to i32
    %c0_i32_0 = arith.constant 0 : i32
    %2 = arith.cmpi ne, %1, %c0_i32_0 : i32
    scf.if %2 {
      %cst_10 = arith.constant 0.000000e+00 : f32
      %12 = vector.broadcast %cst_10 : f32 to vector<160x128xf32>
      %c0_11 = arith.constant 0 : index
      %c0_12 = arith.constant 0 : index
      %13 = vector.load %arg10[%c0_11, %c0_12] : memref<160x128xf32, #tpu.memory_space<vmem>>, vector<160x128xf32>
      tpu.vector_store %arg10[%c0_11, %c0_12], %12 {strides = array<i32>} : memref<160x128xf32, #tpu.memory_space<vmem>>, vector<160x128xf32>,
    } else {
    }
    %c0 = arith.constant 0 : index
    %c0_1 = arith.constant 0 : index
    %3 = vector.load %arg10[%c0, %c0_1] : memref<160x128xf32, #tpu.memory_space<vmem>>, vector<160x128xf32>
    %c0_2 = arith.constant 0 : index
    %c0_3 = arith.constant 0 : index
    %4 = vector.load %arg2[%c0_2, %c0_3] : memref<160x640xbf16, #tpu.memory_space<vmem>>, vector<160x640xbf16>
    %c0_4 = arith.constant 0 : index
    %c0_5 = arith.constant 0 : index
    %5 = vector.load %arg3[%c0_4, %c0_5] : memref<640x128xbf16, #tpu.memory_space<vmem>>, vector<640x128xbf16>
    %cst = arith.constant dense<0.000000e+00> : vector<160x128xf32>
    %6 = tpu.matmul %4, %5, %cst {dimension_numbers = #tpu.dot_dimension_numbers<[1], [0], [0], [1], [0, 0, 1, 1], [], []>} : vector<160x640xbf16>, vector<640x128xbf16>, vector<160x128xf32> -> vector<160x128xf32>
    %7 = arith.addf %3, %6 : vector<160x128xf32>
    %c0_6 = arith.constant 0 : index
    %c0_7 = arith.constant 0 : index
    %8 = vector.load %arg10[%c0_6, %c0_7] : memref<160x128xf32, #tpu.memory_space<vmem>>, vector<160x128xf32>
    tpu.vector_store %arg10[%c0_6, %c0_7], %7 {strides = array<i32>} : memref<160x128xf32, #tpu.memory_space<vmem>>, vector<160x128xf32>,
    %c0_i32_8 = arith.constant 0 : i32
    %9 = arith.cmpi eq, %arg1, %c0_i32_8 : i32
    %10 = arith.extui %9 : i1 to i32
    %c0_i32_9 = arith.constant 0 : i32
    %11 = arith.cmpi ne, %10, %c0_i32_9 : i32
    scf.if %11 {
      %c0_10 = arith.constant 0 : index
      %c0_11 = arith.constant 0 : index
      %12 = vector.load %arg10[%c0_10, %c0_11] : memref<160x128xf32, #tpu.memory_space<vmem>>, vector<160x128xf32>
      %13 = arith.truncf %12 : vector<160x128xf32> to vector<160x128xbf16>
      %c0_12 = arith.constant 0 : index
      %c0_13 = arith.constant 0 : index
      %14 = vector.load %arg6[%c0_12, %c0_13] : memref<128x256xbf16, #tpu.memory_space<vmem>>, vector<128x256xbf16>
      %cst_14 = arith.constant dense<0.000000e+00> : vector<160x256xf32>
      %15 = tpu.matmul %13, %14, %cst_14 {dimension_numbers = #tpu.dot_dimension_numbers<[1], [0], [0], [1], [0, 0, 1, 1], [], []>} : vector<160x128xbf16>, vector<128x256xbf16>, vector<160x256xf32> -> vector<160x256xf32>
      %c0_15 = arith.constant 0 : index
      %c0_16 = arith.constant 0 : index
      %16 = vector.load %arg5[%c0_15, %c0_16] : memref<160x1xf32, #tpu.memory_space<vmem>>, vector<160x1xf32>
      %17 = vector.broadcast %16 : vector<160x1xf32> to vector<160x256xf32>
      %18 = arith.mulf %15, %17 : vector<160x256xf32>
      %c0_17 = arith.constant 0 : index
      %c0_18 = arith.constant 0 : index
      %19 = vector.load %arg4[%c0_17, %c0_18] : memref<160x128xbf16, #tpu.memory_space<vmem>>, vector<160x128xbf16>
      %c0_19 = arith.constant 0 : index
      %c0_20 = arith.constant 0 : index
      %20 = vector.load %arg7[%c0_19, %c0_20] : memref<128x256xbf16, #tpu.memory_space<vmem>>, vector<128x256xbf16>
      %cst_21 = arith.constant dense<0.000000e+00> : vector<160x256xf32>
      %21 = tpu.matmul %19, %20, %cst_21 {dimension_numbers = #tpu.dot_dimension_numbers<[1], [0], [0], [1], [0, 0, 1, 1], [], []>} : vector<160x128xbf16>, vector<128x256xbf16>, vector<160x256xf32> -> vector<160x256xf32>
      %22 = arith.addf %18, %21 : vector<160x256xf32>
      %c0_22 = arith.constant 0 : index
      %c0_23 = arith.constant 0 : index
      %23 = vector.load %arg8[%c0_22, %c0_23] : memref<1x256xf32, #tpu.memory_space<vmem>>, vector<1x256xf32>
      %24 = vector.broadcast %23 : vector<1x256xf32> to vector<160x256xf32>
      %25 = arith.addf %22, %24 : vector<160x256xf32>
      %cst_24 = arith.constant 0.000000e+00 : f32
      %26 = vector.broadcast %cst_24 : f32 to vector<160x256xf32>
      %27 = arith.maximumf %25, %26 : vector<160x256xf32>
      %28 = arith.truncf %27 : vector<160x256xf32> to vector<160x256xbf16>
      %c0_25 = arith.constant 0 : index
      %c0_26 = arith.constant 0 : index
      %29 = vector.load %arg9[%c0_25, %c0_26] : memref<160x256xbf16, #tpu.memory_space<vmem>>, vector<160x256xbf16>
      tpu.vector_store %arg9[%c0_25, %c0_26], %28 {strides = array<i32>} : memref<160x256xbf16, #tpu.memory_space<vmem>>, vector<160x256xbf16>,
    } else {
    }
    return
  }
  func.func @transform_0(%arg0: i32, %arg1: i32) -> (i32, i32) {
    %c0_i32 = arith.constant 0 : i32
    return %arg0, %arg1 : i32, i32
  }
  func.func @transform_1(%arg0: i32, %arg1: i32) -> (i32, i32) {
    %c0_i32 = arith.constant 0 : i32
    %c0_i32_0 = arith.constant 0 : i32
    return %arg1, %c0_i32 : i32, i32
  }
  func.func @transform_2(%arg0: i32, %arg1: i32) -> (i32, i32) {
    %c0_i32 = arith.constant 0 : i32
    %c0_i32_0 = arith.constant 0 : i32
    return %arg0, %c0_i32 : i32, i32
  }
  func.func @transform_3(%arg0: i32, %arg1: i32) -> (i32, i32) {
    %c0_i32 = arith.constant 0 : i32
    %c0_i32_0 = arith.constant 0 : i32
    return %arg0, %c0_i32 : i32, i32
  }
  func.func @transform_4(%arg0: i32, %arg1: i32) -> (i32, i32) {
    %c0_i32 = arith.constant 0 : i32
    %c0_i32_0 = arith.constant 0 : i32
    %c0_i32_1 = arith.constant 0 : i32
    return %c0_i32, %c0_i32_0 : i32, i32
  }
  func.func @transform_5(%arg0: i32, %arg1: i32) -> (i32, i32) {
    %c0_i32 = arith.constant 0 : i32
    %c0_i32_0 = arith.constant 0 : i32
    %c0_i32_1 = arith.constant 0 : i32
    return %c0_i32, %c0_i32_0 : i32, i32
  }
  func.func @transform_6(%arg0: i32, %arg1: i32) -> (i32, i32) {
    %c0_i32 = arith.constant 0 : i32
    %c0_i32_0 = arith.constant 0 : i32
    %c0_i32_1 = arith.constant 0 : i32
    return %c0_i32, %c0_i32_0 : i32, i32
  }
  func.func @transform_7(%arg0: i32, %arg1: i32) -> (i32, i32) {
    %c0_i32 = arith.constant 0 : i32
    %c0_i32_0 = arith.constant 0 : i32
    return %arg0, %c0_i32 : i32, i32
  }
}

</mosaic_0001>

<llo_original>
// kernel: tpu_custom_call.1
$region0: #{tpu_custom_call.1}
  #allocation0 [shape = 'u32[]', space=smem, size = 0x4, offset = 0x4, fixed_abs, tag = 'smem constant byte address 0x4 - core index']
  #allocation1 [shape = 'u32[72,128]{1,0:T(1,128)}', space=vmem, size = 0x9000, scoped, tag = 'internal scratch']
  #allocation2 [shape = 'f32[160,128]{1,0:T(8,128)}', space=vmem, size = 0x14000, scoped, tag = 'scratch operand']
  %s0 = inlined_call_operand.hbm [shape: bf16[320,640], index: 0, kind: input, shape index: {}]
  %s1 = inlined_call_operand.vmem [shape: bf16[640,128], index: 1, kind: input, shape index: {}]
  %s2 = inlined_call_operand.hbm [shape: bf16[640,128], index: 2, kind: input, shape index: {}]
  %s3 = inlined_call_operand.vmem [shape: f32[320,1], index: 3, kind: input, shape index: {}]
  %s4 = inlined_call_operand.hbm [shape: bf16[128,256], index: 4, kind: input, shape index: {}]
  %s5 = inlined_call_operand.hbm [shape: bf16[128,256], index: 5, kind: input, shape index: {}]
  %s6 = inlined_call_operand.vmem [shape: f32[1,256], index: 6, kind: input, shape index: {}]
  %s7 = inlined_call_operand.hbm [shape: bf16[320,256], index: 7, kind: output, shape index: {}]
  %s8 = sld [smem:[#allocation0]]
  $region85: #{tpu_custom_call.1} parent=0
    _
  %s10 = ssub.s32 1, %s8
  %s11 = scalar_select 0, %s10, %s8
  $region1: #{tpu_custom_call.1} parent=0
    #allocation3 [shape = 'u8[409600]{0}', space=vmem, size = 0x64000, scoped, tag = 'input window, operand 0']
    #allocation4 [shape = 's32[2]{0}', space=sflag, size = 0x8, scoped, tag = 'scoped memory for tpu_custom_call.1']
    #allocation5 [shape = 's32[2]{0}', space=sflag, size = 0x8, scoped, tag = 'scoped memory for tpu_custom_call.1']
    #allocation6 [shape = 'u8[81920]{0}', space=vmem, size = 0x14000, scoped, tag = 'input window, operand 2']
    #allocation7 [shape = 's32[2]{0}', space=sflag, size = 0x8, scoped, tag = 'scoped memory for tpu_custom_call.1']
    #allocation8 [shape = 'u8[65536]{0}', space=vmem, size = 0x10000, scoped, tag = 'input window, operand 4, single buffered']
    #allocation9 [shape = 'u8[65536]{0}', space=vmem, size = 0x10000, scoped, tag = 'input window, operand 5, single buffered']
    #allocation10 [shape = 's32[1]{0}', space=sflag, size = 0x4, scoped, tag = 'scoped memory for tpu_custom_call.1']
    #allocation11 [shape = 'u8[163840]{0}', space=vmem, size = 0x28000, scoped, tag = 'output window, operand 0']
    %12 = vsyncpa [#allocation4], 0
    %s13 = scalar_lea.sflag [#allocation4], 1
    %14 = vsyncpa %s13, 0
    %15 = vsyncpa [#allocation7], 0
    %s16 = scalar_lea.sflag [#allocation7], 1
    %17 = vsyncpa %s16, 0
    %18 = vsyncpa [#allocation10], 0
    %19 = vsyncpa [#allocation5], 0
    %s20 = scalar_lea.sflag [#allocation5], 1
    %21 = vsyncpa %s20, 0
    loop: start=0, step=1, limit=4
    $region2: #{tpu_custom_call.1} parent=1 // loop_pre_header
      _
    $region3: #{tpu_custom_call.1} parent=1 // loop_header
      %s23 = sphi 0, %s27
      %p24 = scmp.ge.s32.totalorder %s23, 4
      %s30 = sphi 0, %s42
      %s31 = sphi 0, %s38
      %s32 = sphi 0, %s30
      %s33 = sphi 0, %s31
      %s34 = sphi 0, %s32
      %s35 = sphi 0, %s33
      %s47 = sphi 0, %s49
      %s50 = sphi 0, %s47
      %s51 = sphi 0, %s50
      %s67 = sphi 0, %s51
      %s73 = sphi 0, %s75
      %s76 = sphi 0, %s73
      %s77 = sphi 0, %s76
      %s93 = sphi 0, %s77
      %s99 = sphi 0, %s101
      %s102 = sphi 0, %s99
      %s103 = sphi 0, %s102
      %s119 = sphi 0, %s103
      %s125 = sphi 0, %s127
      %s128 = sphi 0, %s125
      %s129 = sphi 0, %s128
      %s145 = sphi 0, %s129
      %s149 = sphi 0, %s149
      %s151 = sphi 0, %s149
      %s152 = sphi 0, %s151
      %s166 = sphi 0, %s152
      %s170 = sphi 0, %s170
      %s172 = sphi 0, %s170
      %s173 = sphi 0, %s172
      %s187 = sphi 0, %s173
      %s191 = sphi 0, %s191
      %s193 = sphi 0, %s191
      %s194 = sphi 0, %s193
      %s208 = sphi 0, %s194
      %s214 = sphi 0, %s216
      %s217 = sphi 0, %s214
      %s218 = sphi 0, %s217
      %s234 = sphi 0, %s218
    $region4: #{tpu_custom_call.1} parent=1 // loop_header_branch
      %26 = sbr.rel (%p24) target = $region8
    $region5: #{tpu_custom_call.1} parent=1 // loop_body
      %s28 = ssub.s32 %s23, 1
      %s29 = ssub.s32 %s23, 2
      %s36 = sadd.s32 1, %s31
      %p37 = scmp.ge.s32.totalorder %s36, 1
      %s38 = scalar_select %p37, 0, %s36
      %s39 = sadd.s32 1, %s30
      %s40 = scalar_select %p37, %s39, %s30
      %p41 = scmp.ge.s32.totalorder %s40, 2
      %s42 = scalar_select %p41, 0, %s40
      %s43 = ssub.s32 %s30, %s42
      %s44 = ssub.s32 %s31, %s38
      %s45 = sor.u32 %s43, %s44
      %p46 = scmp.eq.s32.totalorder %s45, 0
      %s48 = sadd.s32 %s47, 1
      %s49 = scalar_select %p46, %s47, %s48
      %p52 = pneg %p46
      %p53 = scmp.eq.s32.totalorder %s23, 1
      %p54 = por %p52, %p53
      %p55 = scmp.ne.s32.totalorder %s47, %s50
      %p56 = scmp.eq.s32.totalorder %s23, 0
      %p57 = por %p55, %p56
      %p58 = scmp.ne.s32.totalorder %s47, %s50
      %p59 = scmp.eq.s32.totalorder %s28, 1
      %p60 = por %p58, %p59
      %p61 = scmp.ne.s32.totalorder %s50, %s51
      %p62 = scmp.eq.s32.totalorder %s28, 0
      %p63 = por %p61, %p62
      %p64 = scmp.ne.s32.totalorder %s50, %s51
      %p65 = scmp.eq.s32.totalorder %s29, 1
      %p66 = por %p64, %p65
      %p68 = scmp.ne.s32.totalorder %s51, %s67
      %p69 = scmp.eq.s32.totalorder %s29, 0
      %p70 = por %p68, %p69
      %s71 = ssub.s32 %s31, %s38
      %p72 = scmp.eq.s32.totalorder %s71, 0
      %s74 = sadd.s32 %s73, 1
      %s75 = scalar_select %p72, %s73, %s74
      %p78 = pneg %p72
      %p79 = scmp.eq.s32.totalorder %s23, 1
      %p80 = por %p78, %p79
      %p81 = scmp.ne.s32.totalorder %s73, %s76
      %p82 = scmp.eq.s32.totalorder %s23, 0
      %p83 = por %p81, %p82
      %p84 = scmp.ne.s32.totalorder %s73, %s76
      %p85 = scmp.eq.s32.totalorder %s28, 1
      %p86 = por %p84, %p85
      %p87 = scmp.ne.s32.totalorder %s76, %s77
      %p88 = scmp.eq.s32.totalorder %s28, 0
      %p89 = por %p87, %p88
      %p90 = scmp.ne.s32.totalorder %s76, %s77
      %p91 = scmp.eq.s32.totalorder %s29, 1
      %p92 = por %p90, %p91
      %p94 = scmp.ne.s32.totalorder %s77, %s93
      %p95 = scmp.eq.s32.totalorder %s29, 0
      %p96 = por %p94, %p95
      %s97 = ssub.s32 %s30, %s42
      %p98 = scmp.eq.s32.totalorder %s97, 0
      %s100 = sadd.s32 %s99, 1
      %s101 = scalar_select %p98, %s99, %s100
      %p104 = pneg %p98
      %p105 = scmp.eq.s32.totalorder %s23, 1
      %p106 = por %p104, %p105
      %p107 = scmp.ne.s32.totalorder %s99, %s102
      %p108 = scmp.eq.s32.totalorder %s23, 0
      %p109 = por %p107, %p108
      %p110 = scmp.ne.s32.totalorder %s99, %s102
      %p111 = scmp.eq.s32.totalorder %s28, 1
      %p112 = por %p110, %p111
      %p113 = scmp.ne.s32.totalorder %s102, %s103
      %p114 = scmp.eq.s32.totalorder %s28, 0
      %p115 = por %p113, %p114
      %p116 = scmp.ne.s32.totalorder %s102, %s103
      %p117 = scmp.eq.s32.totalorder %s29, 1
      %p118 = por %p116, %p117
      %p120 = scmp.ne.s32.totalorder %s103, %s119
      %p121 = scmp.eq.s32.totalorder %s29, 0
      %p122 = por %p120, %p121
      %s123 = ssub.s32 %s30, %s42
      %p124 = scmp.eq.s32.totalorder %s123, 0
      %s126 = sadd.s32 %s125, 1
      %s127 = scalar_select %p124, %s125, %s126
      %p130 = pneg %p124
      %p131 = scmp.eq.s32.totalorder %s23, 1
      %p132 = por %p130, %p131
      %p133 = scmp.ne.s32.totalorder %s125, %s128
      %p134 = scmp.eq.s32.totalorder %s23, 0
      %p135 = por %p133, %p134
      %p136 = scmp.ne.s32.totalorder %s125, %s128
      %p137 = scmp.eq.s32.totalorder %s28, 1
      %p138 = por %p136, %p137
      %p139 = scmp.ne.s32.totalorder %s128, %s129
      %p140 = scmp.eq.s32.totalorder %s28, 0
      %p141 = por %p139, %p140
      %p142 = scmp.ne.s32.totalorder %s128, %s129
      %p143 = scmp.eq.s32.totalorder %s29, 1
      %p144 = por %p142, %p143
      %p146 = scmp.ne.s32.totalorder %s129, %s145
      %p147 = scmp.eq.s32.totalorder %s29, 0
      %p148 = por %p146, %p147
      %s150 = sadd.s32 %s149, 1
      %p153 = scmp.eq.s32.totalorder %s23, 1
      %p154 = scmp.ne.s32.totalorder %s149, %s151
      %p155 = scmp.eq.s32.totalorder %s23, 0
      %p156 = por %p154, %p155
      %p157 = scmp.ne.s32.totalorder %s149, %s151
      %p158 = scmp.eq.s32.totalorder %s28, 1
      %p159 = por %p157, %p158
      %p160 = scmp.ne.s32.totalorder %s151, %s152
      %p161 = scmp.eq.s32.totalorder %s28, 0
      %p162 = por %p160, %p161
      %p163 = scmp.ne.s32.totalorder %s151, %s152
      %p164 = scmp.eq.s32.totalorder %s29, 1
      %p165 = por %p163, %p164
      %p167 = scmp.ne.s32.totalorder %s152, %s166
      %p168 = scmp.eq.s32.totalorder %s29, 0
      %p169 = por %p167, %p168
      %s171 = sadd.s32 %s170, 1
      %p174 = scmp.eq.s32.totalorder %s23, 1
      %p175 = scmp.ne.s32.totalorder %s170, %s172
      %p176 = scmp.eq.s32.totalorder %s23, 0
      %p177 = por %p175, %p176
      %p178 = scmp.ne.s32.totalorder %s170, %s172
      %p179 = scmp.eq.s32.totalorder %s28, 1
      %p180 = por %p178, %p179
      %p181 = scmp.ne.s32.totalorder %s172, %s173
      %p182 = scmp.eq.s32.totalorder %s28, 0
      %p183 = por %p181, %p182
      %p184 = scmp.ne.s32.totalorder %s172, %s173
      %p185 = scmp.eq.s32.totalorder %s29, 1
      %p186 = por %p184, %p185
      %p188 = scmp.ne.s32.totalorder %s173, %s187
      %p189 = scmp.eq.s32.totalorder %s29, 0
      %p190 = por %p188, %p189
      %s192 = sadd.s32 %s191, 1
      %p195 = scmp.eq.s32.totalorder %s23, 1
      %p196 = scmp.ne.s32.totalorder %s191, %s193
      %p197 = scmp.eq.s32.totalorder %s23, 0
      %p198 = por %p196, %p197
      %p199 = scmp.ne.s32.totalorder %s191, %s193
      %p200 = scmp.eq.s32.totalorder %s28, 1
      %p201 = por %p199, %p200
      %p202 = scmp.ne.s32.totalorder %s193, %s194
      %p203 = scmp.eq.s32.totalorder %s28, 0
      %p204 = por %p202, %p203
      %p205 = scmp.ne.s32.totalorder %s193, %s194
      %p206 = scmp.eq.s32.totalorder %s29, 1
      %p207 = por %p205, %p206
      %p209 = scmp.ne.s32.totalorder %s194, %s208
      %p210 = scmp.eq.s32.totalorder %s29, 0
      %p211 = por %p209, %p210
      %s212 = ssub.s32 %s30, %s42
      %p213 = scmp.eq.s32.totalorder %s212, 0
      %s215 = sadd.s32 %s214, 1
      %s216 = scalar_select %p213, %s214, %s215
      %p219 = pneg %p213
      %p220 = scmp.eq.s32.totalorder %s23, 1
      %p221 = por %p219, %p220
      %p222 = scmp.ne.s32.totalorder %s214, %s217
      %p223 = scmp.eq.s32.totalorder %s23, 0
      %p224 = por %p222, %p223
      %p225 = scmp.ne.s32.totalorder %s214, %s217
      %p226 = scmp.eq.s32.totalorder %s28, 1
      %p227 = por %p225, %p226
      %p228 = scmp.ne.s32.totalorder %s217, %s218
      %p229 = scmp.eq.s32.totalorder %s28, 0
      %p230 = por %p228, %p229
      %p231 = scmp.ne.s32.totalorder %s217, %s218
      %p232 = scmp.eq.s32.totalorder %s29, 1
      %p233 = por %p231, %p232
      %p235 = scmp.ne.s32.totalorder %s218, %s234
      %p236 = scmp.eq.s32.totalorder %s29, 0
      %p237 = por %p235, %p236
      %p238 = scmp.le.s32.totalorder 1, %s23
      %p239 = scmp.lt.s32.totalorder %s23, 3
      %p240 = pnand %p238, %p239
      %p241 = pneg %p240
      // Predicated region
      $region9: #{tpu_custom_call.1} parent=5 // pred_check
        _
      $region10: #{tpu_custom_call.1} parent=5 // pred_check_branch
        %243 = sbr.rel (%p240) target = $region12
      $region11: #{tpu_custom_call.1} parent=5 // pred_region
        %s244 = ssub.s32 %s23, 1
        // Predicated region
        $region13: #{tpu_custom_call.1} parent=11 // pred_check
          %p245 = pneg %p89
        $region14: #{tpu_custom_call.1} parent=11 // pred_check_branch
          %247 = sbr.rel (%p245) target = $region16
        $region15: #{tpu_custom_call.1} parent=11 // pred_region
          %s248 = smul.u32 80, %s33
          %p249 = scmp.lt.s32.totalorder %s248, 79
          %s250 = scalar_select %p249, %s248, 79
          %s251 = smul.addr %s250, 4
          %s252 = scalar_lea.vmem %s1, %s251
          %s253 = smul.u32 80, %s33
        $region16: #{tpu_custom_call.1} parent=11 // pred_fallthru
          _
        // Predicated region
        $region17: #{tpu_custom_call.1} parent=11 // pred_check
          %p254 = pneg %p162
        $region18: #{tpu_custom_call.1} parent=11 // pred_check_branch
          %256 = sbr.rel (%p254) target = $region20
        $region19: #{tpu_custom_call.1} parent=11 // pred_region
          %258 = vsyncadd [#allocation7], 0
          %s259 = sshll.u32 %s4, 4
          %s260 = int_to_ptr.hbm [resolvable:$true] %s259
          %s261 = sshll.u32 [#allocation8], 4
          %s262 = int_to_ptr.vmem [resolvable:$true] %s261
          %267 = dma.hbm_to_vmem [thread:$0]  %s260, 2048, %s262, [#allocation7], 128, 128, 8
        $region20: #{tpu_custom_call.1} parent=11 // pred_fallthru
          _
        // Predicated region
        $region21: #{tpu_custom_call.1} parent=11 // pred_check
          %p268 = pneg %p183
        $region22: #{tpu_custom_call.1} parent=11 // pred_check_branch
          %270 = sbr.rel (%p268) target = $region24
        $region23: #{tpu_custom_call.1} parent=11 // pred_region
          %272 = vsyncadd [#allocation10], 0
          %s273 = sshll.u32 %s5, 4
          %s274 = int_to_ptr.hbm [resolvable:$true] %s273
          %s275 = sshll.u32 [#allocation9], 4
          %s276 = int_to_ptr.vmem [resolvable:$true] %s275
          %281 = dma.hbm_to_vmem [thread:$0]  %s274, 2048, %s276, [#allocation10], 128, 128, 8
        $region24: #{tpu_custom_call.1} parent=11 // pred_fallthru
          _
        // Predicated region
        $region25: #{tpu_custom_call.1} parent=11 // pred_check
          %p282 = pneg %p204
        $region26: #{tpu_custom_call.1} parent=11 // pred_check_branch
          %284 = sbr.rel (%p282) target = $region28
        $region27: #{tpu_custom_call.1} parent=11 // pred_region
          _
        $region28: #{tpu_custom_call.1} parent=11 // pred_fallthru
          _
      $region12: #{tpu_custom_call.1} parent=5 // pred_fallthru
        _
      %p285 = scmp.lt.s32.totalorder %s23, 2
      // Predicated region
      $region29: #{tpu_custom_call.1} parent=5 // pred_check
        %p286 = pneg %p285
      $region30: #{tpu_custom_call.1} parent=5 // pred_check_branch
        %288 = sbr.rel (%p286) target = $region32
      $region31: #{tpu_custom_call.1} parent=5 // pred_region
        // Predicated region
        $region33: #{tpu_custom_call.1} parent=31 // pred_check
          %p289 = pneg %p57
        $region34: #{tpu_custom_call.1} parent=31 // pred_check_branch
          %291 = sbr.rel (%p289) target = $region36
        $region35: #{tpu_custom_call.1} parent=31 // pred_region
          %s292 = sand.u32 %s47, 1
          %s293 = scalar_lea.sflag [#allocation4], %s292
          %s294 = sand.u32 %s47, 1
          %s295 = smul.addr %s294, 400
          %s296 = scalar_lea.vmem [#allocation3], %s295
          %s297 = smul.u32 20, %s30
          %s298 = smul.u32 5, %s31
          %300 = vsyncadd %s293, 0
          %s301 = smul.addr %s297, 5
          %s302 = sadd.s32 %s298, %s301
          %s303 = smul.addr %s302, 4
          %s304 = scalar_lea.hbm %s0, %s303
          %s305 = sshll.u32 %s304, 4
          %s306 = int_to_ptr.hbm [resolvable:$true] %s305
          %s307 = sshll.u32 %s296, 4
          %s308 = int_to_ptr.vmem [resolvable:$true] %s307
          %313 = dma.hbm_to_vmem [thread:$0]  %s306, 6400, %s308, %s293, 320, 320, 20
        $region36: #{tpu_custom_call.1} parent=31 // pred_fallthru
          _
        // Predicated region
        $region37: #{tpu_custom_call.1} parent=31 // pred_check
          %p314 = pneg %p109
        $region38: #{tpu_custom_call.1} parent=31 // pred_check_branch
          %316 = sbr.rel (%p314) target = $region40
        $region39: #{tpu_custom_call.1} parent=31 // pred_region
          %s317 = sand.u32 %s23, 1
          %s318 = scalar_lea.sflag [#allocation7], %s317
          %s319 = sand.u32 %s99, 1
          %s320 = smul.addr %s319, 80
          %s321 = scalar_lea.vmem [#allocation6], %s320
          %s322 = smul.u32 20, %s30
          %324 = vsyncadd %s318, 0
          %s325 = smul.addr %s322, 4
          %s326 = scalar_lea.hbm %s2, %s325
          %s327 = sshll.u32 %s326, 4
          %s328 = int_to_ptr.hbm [resolvable:$true] %s327
          %s329 = sshll.u32 %s321, 4
          %s330 = int_to_ptr.vmem [resolvable:$true] %s329
          %335 = dma.hbm_to_vmem [thread:$0]  %s328, 1280, %s330, %s318, 64, 64, 4
        $region40: #{tpu_custom_call.1} parent=31 // pred_fallthru
          _
        // Predicated region
        $region41: #{tpu_custom_call.1} parent=31 // pred_check
          %p336 = pneg %p135
        $region42: #{tpu_custom_call.1} parent=31 // pred_check_branch
          %338 = sbr.rel (%p336) target = $region44
        $region43: #{tpu_custom_call.1} parent=31 // pred_region
          %s339 = smul.u32 20, %s30
          %p340 = scmp.lt.s32.totalorder %s339, 39
          %s341 = scalar_select %p340, %s339, 39
          %s342 = smul.addr %s341, 8
          %s343 = scalar_lea.vmem %s3, %s342
          %s344 = smul.u32 20, %s30
        $region44: #{tpu_custom_call.1} parent=31 // pred_fallthru
          _
      $region32: #{tpu_custom_call.1} parent=5 // pred_fallthru
        _
      %p345 = scmp.le.s32.totalorder 1, %s23
      %p346 = scmp.lt.s32.totalorder %s23, 3
      %p347 = pnand %p345, %p346
      %p348 = pneg %p347
      // Predicated region
      $region45: #{tpu_custom_call.1} parent=5 // pred_check
        _
      $region46: #{tpu_custom_call.1} parent=5 // pred_check_branch
        %350 = sbr.rel (%p347) target = $region48
      $region47: #{tpu_custom_call.1} parent=5 // pred_region
        %s351 = ssub.s32 %s23, 1
        %s352 = sand.u32 %s50, 1
        %s353 = scalar_lea.sflag [#allocation4], %s352
        %s354 = sand.u32 %s50, 1
        %s355 = smul.addr %s354, 400
        %s356 = scalar_lea.vmem [#allocation3], %s355
        // Predicated region
        $region49: #{tpu_custom_call.1} parent=47 // pred_check
          %p357 = pneg %p63
        $region50: #{tpu_custom_call.1} parent=47 // pred_check_branch
          %359 = sbr.rel (%p357) target = $region52
        $region51: #{tpu_custom_call.1} parent=47 // pred_region
          %361 = dma.done %s353, 6400
        $region52: #{tpu_custom_call.1} parent=47 // pred_fallthru
          _
        %s362 = sand.u32 %s28, 1
        %s363 = scalar_lea.sflag [#allocation7], %s362
        %s364 = sand.u32 %s102, 1
        %s365 = smul.addr %s364, 80
        %s366 = scalar_lea.vmem [#allocation6], %s365
        // Predicated region
        $region53: #{tpu_custom_call.1} parent=47 // pred_check
          %p367 = pneg %p115
        $region54: #{tpu_custom_call.1} parent=47 // pred_check_branch
          %369 = sbr.rel (%p367) target = $region56
        $region55: #{tpu_custom_call.1} parent=47 // pred_region
          %371 = dma.done %s363, 1280
        $region56: #{tpu_custom_call.1} parent=47 // pred_fallthru
          _
        // Predicated region
        $region57: #{tpu_custom_call.1} parent=47 // pred_check
          %p372 = pneg %p162
        $region58: #{tpu_custom_call.1} parent=47 // pred_check_branch
          %374 = sbr.rel (%p372) target = $region60
        $region59: #{tpu_custom_call.1} parent=47 // pred_region
          %376 = dma.done [#allocation7], 2048
        $region60: #{tpu_custom_call.1} parent=47 // pred_fallthru
          _
        // Predicated region
        $region61: #{tpu_custom_call.1} parent=47 // pred_check
          %p377 = pneg %p183
        $region62: #{tpu_custom_call.1} parent=47 // pred_check_branch
          %379 = sbr.rel (%p377) target = $region64
        $region63: #{tpu_custom_call.1} parent=47 // pred_region
          %381 = dma.done [#allocation10], 2048
        $region64: #{tpu_custom_call.1} parent=47 // pred_fallthru
          _
        %s382 = sand.u32 %s50, 1
        %s383 = scalar_lea.sflag [#allocation4], %s382
        %s384 = sand.u32 %s50, 1
        %s385 = smul.addr %s384, 400
        %s386 = scalar_lea.vmem [#allocation3], %s385
        %p387 = pneg %p63
        %p388 = pneg %p60
        %s389 = smul.u32 80, %s33
        %p390 = scmp.lt.s32.totalorder %s389, 79
        %s391 = scalar_select %p390, %s389, 79
        %s392 = smul.addr %s391, 4
        %s393 = scalar_lea.vmem %s1, %s392
        %p394 = pneg %p89
        %p395 = pneg %p86
        %s396 = sand.u32 %s28, 1
        %s397 = scalar_lea.sflag [#allocation7], %s396
        %s398 = sand.u32 %s102, 1
        %s399 = smul.addr %s398, 80
        %s400 = scalar_lea.vmem [#allocation6], %s399
        %p401 = pneg %p115
        %p402 = pneg %p112
        %s403 = smul.u32 20, %s32
        %p404 = scmp.lt.s32.totalorder %s403, 39
        %s405 = scalar_select %p404, %s403, 39
        %s406 = smul.addr %s405, 8
        %s407 = scalar_lea.vmem %s3, %s406
        %p408 = pneg %p141
        %p409 = pneg %p138
        %p410 = pneg %p162
        %p411 = pneg %p159
        %p412 = pneg %p183
        %p413 = pneg %p180
        %p414 = pneg %p204
        %p415 = pneg %p201
        %p416 = pneg %p230
        %p417 = pneg %p227
        %s418 = sand.u32 %s217, 1
        %s419 = scalar_lea.sflag [#allocation5], %s418
        %s420 = sand.u32 %s217, 1
        %s421 = smul.addr %s420, 160
        %s422 = scalar_lea.vmem [#allocation11], %s421
        %s423 = smul.u32 20, %s32
        %s424 = smul.u32 5, %s33
        %s425 = smul.u32 80, %s33
        %p426 = scmp.lt.s32.totalorder %s425, 79
        %s427 = scalar_select %p426, %s425, 79
        %s428 = smul.addr %s427, 4
        %s429 = scalar_lea.vmem %s1, %s428
        %s430 = smul.u32 80, %s33
        %s431 = smul.u32 20, %s32
        %s432 = smul.u32 20, %s32
        %p433 = scmp.lt.s32.totalorder %s432, 39
        %s434 = scalar_select %p433, %s432, 39
        %s435 = smul.addr %s434, 8
        %s436 = scalar_lea.vmem %s3, %s435
        %s437 = smul.u32 20, %s32
        %s438 = smul.u32 20, %s32
        %p439 = scmp.eq.s32.totalorder %s33, 0
        // Predicated region
        $region65: #{tpu_custom_call.1} parent=47 // pred_check
          %p440 = pneg %p439
        $region66: #{tpu_custom_call.1} parent=47 // pred_check_branch
          %442 = sbr.rel (%p440) target = $region68
        $region67: #{tpu_custom_call.1} parent=47 // pred_region
          %443 = vst [vmem:[#allocation2] sm:$0xff] 0.0
          %444 = vst [vmem:[#allocation2 + $0x8] sm:$0xff] 0.0
          %445 = vst [vmem:[#allocation2 + $0x10] sm:$0xff] 0.0
          %446 = vst [vmem:[#allocation2 + $0x18] sm:$0xff] 0.0
          %447 = vst [vmem:[#allocation2 + $0x20] sm:$0xff] 0.0
          %448 = vst [vmem:[#allocation2 + $0x28] sm:$0xff] 0.0
          %449 = vst [vmem:[#allocation2 + $0x30] sm:$0xff] 0.0
          %450 = vst [vmem:[#allocation2 + $0x38] sm:$0xff] 0.0
          %451 = vst [vmem:[#allocation2 + $0x40] sm:$0xff] 0.0
          %452 = vst [vmem:[#allocation2 + $0x48] sm:$0xff] 0.0
          %453 = vst [vmem:[#allocation2 + $0x50] sm:$0xff] 0.0
          %454 = vst [vmem:[#allocation2 + $0x58] sm:$0xff] 0.0
          %455 = vst [vmem:[#allocation2 + $0x60] sm:$0xff] 0.0
          %456 = vst [vmem:[#allocation2 + $0x68] sm:$0xff] 0.0
          %457 = vst [vmem:[#allocation2 + $0x70] sm:$0xff] 0.0
          %458 = vst [vmem:[#allocation2 + $0x78] sm:$0xff] 0.0
          %459 = vst [vmem:[#allocation2 + $0x80] sm:$0xff] 0.0
          %460 = vst [vmem:[#allocation2 + $0x88] sm:$0xff] 0.0
          %461 = vst [vmem:[#allocation2 + $0x90] sm:$0xff] 0.0
          %462 = vst [vmem:[#allocation2 + $0x98] sm:$0xff] 0.0
        $region68: #{tpu_custom_call.1} parent=47 // pred_fallthru
          _
        %v463 = vld [vmem:[#allocation2] sm:$0xff]
        %v464 = vld [vmem:[#allocation2 + $0x8] sm:$0xff]
        %v465 = vld [vmem:[#allocation2 + $0x10] sm:$0xff]
        %v466 = vld [vmem:[#allocation2 + $0x18] sm:$0xff]
        %v467 = vld [vmem:[#allocation2 + $0x20] sm:$0xff]
        %v468 = vld [vmem:[#allocation2 + $0x28] sm:$0xff]
        %v469 = vld [vmem:[#allocation2 + $0x30] sm:$0xff]
        %v470 = vld [vmem:[#allocation2 + $0x38] sm:$0xff]
        %v471 = vld [vmem:[#allocation2 + $0x40] sm:$0xff]
        %v472 = vld [vmem:[#allocation2 + $0x48] sm:$0xff]
        %v473 = vld [vmem:[#allocation2 + $0x50] sm:$0xff]
        %v474 = vld [vmem:[#allocation2 + $0x58] sm:$0xff]
        %v475 = vld [vmem:[#allocation2 + $0x60] sm:$0xff]
        %v476 = vld [vmem:[#allocation2 + $0x68] sm:$0xff]
        %v477 = vld [vmem:[#allocation2 + $0x70] sm:$0xff]
        %v478 = vld [vmem:[#allocation2 + $0x78] sm:$0xff]
        %v479 = vld [vmem:[#allocation2 + $0x80] sm:$0xff]
        %v480 = vld [vmem:[#allocation2 + $0x88] sm:$0xff]
        %v481 = vld [vmem:[#allocation2 + $0x90] sm:$0xff]
        %v482 = vld [vmem:[#allocation2 + $0x98] sm:$0xff]
        %v483 = vld [vmem:[%s356] sm:$0xff]
        %v484 = vld [vmem:[%s356 + $0x8] sm:$0xff]
        %v485 = vld [vmem:[%s356 + $0x10] sm:$0xf]
        %v486 = vld [vmem:[%s356 + $0x14] sm:$0xff]
        %v487 = vld [vmem:[%s356 + $0x1c] sm:$0xff]
        %v488 = vld [vmem:[%s356 + $0x24] sm:$0xf]
        %v489 = vld [vmem:[%s356 + $0x28] sm:$0xff]
        %v490 = vld [vmem:[%s356 + $0x30] sm:$0xff]
        %v491 = vld [vmem:[%s356 + $0x38] sm:$0xf]
        %v492 = vld [vmem:[%s356 + $0x3c] sm:$0xff]
        %v493 = vld [vmem:[%s356 + $0x44] sm:$0xff]
        %v494 = vld [vmem:[%s356 + $0x4c] sm:$0xf]
        %v495 = vld [vmem:[%s356 + $0x50] sm:$0xff]
        %v496 = vld [vmem:[%s356 + $0x58] sm:$0xff]
        %v497 = vld [vmem:[%s356 + $0x60] sm:$0xf]
        %v498 = vld [vmem:[%s356 + $0x64] sm:$0xff]
        %v499 = vld [vmem:[%s356 + $0x6c] sm:$0xff]
        %v500 = vld [vmem:[%s356 + $0x74] sm:$0xf]
        %v501 = vld [vmem:[%s356 + $0x78] sm:$0xff]
        %v502 = vld [vmem:[%s356 + $0x80] sm:$0xff]
        %v503 = vld [vmem:[%s356 + $0x88] sm:$0xf]
        %v504 = vld [vmem:[%s356 + $0x8c] sm:$0xff]
        %v505 = vld [vmem:[%s356 + $0x94] sm:$0xff]
        %v506 = vld [vmem:[%s356 + $0x9c] sm:$0xf]
        %v507 = vld [vmem:[%s356 + $0xa0] sm:$0xff]
        %v508 = vld [vmem:[%s356 + $0xa8] sm:$0xff]
        %v509 = vld [vmem:[%s356 + $0xb0] sm:$0xf]
        %v510 = vld [vmem:[%s356 + $0xb4] sm:$0xff]
        %v511 = vld [vmem:[%s356 + $0xbc] sm:$0xff]
        %v512 = vld [vmem:[%s356 + $0xc4] sm:$0xf]
        %v513 = vld [vmem:[%s356 + $0xc8] sm:$0xff]
        %v514 = vld [vmem:[%s356 + $0xd0] sm:$0xff]
        %v515 = vld [vmem:[%s356 + $0xd8] sm:$0xf]
        %v516 = vld [vmem:[%s356 + $0xdc] sm:$0xff]
        %v517 = vld [vmem:[%s356 + $0xe4] sm:$0xff]
        %v518 = vld [vmem:[%s356 + $0xec] sm:$0xf]
        %v519 = vld [vmem:[%s356 + $0xf0] sm:$0xff]
        %v520 = vld [vmem:[%s356 + $0xf8] sm:$0xff]
        %v521 = vld [vmem:[%s356 + $0x100] sm:$0xf]
        %v522 = vld [vmem:[%s356 + $0x104] sm:$0xff]
        %v523 = vld [vmem:[%s356 + $0x10c] sm:$0xff]
        %v524 = vld [vmem:[%s356 + $0x114] sm:$0xf]
        %v525 = vld [vmem:[%s356 + $0x118] sm:$0xff]
        %v526 = vld [vmem:[%s356 + $0x120] sm:$0xff]
        %v527 = vld [vmem:[%s356 + $0x128] sm:$0xf]
        %v528 = vld [vmem:[%s356 + $0x12c] sm:$0xff]
        %v529 = vld [vmem:[%s356 + $0x134] sm:$0xff]
        %v530 = vld [vmem:[%s356 + $0x13c] sm:$0xf]
        %v531 = vld [vmem:[%s356 + $0x140] sm:$0xff]
        %v532 = vld [vmem:[%s356 + $0x148] sm:$0xff]
        %v533 = vld [vmem:[%s356 + $0x150] sm:$0xf]
        %v534 = vld [vmem:[%s356 + $0x154] sm:$0xff]
        %v535 = vld [vmem:[%s356 + $0x15c] sm:$0xff]
        %v536 = vld [vmem:[%s356 + $0x164] sm:$0xf]
        %v537 = vld [vmem:[%s356 + $0x168] sm:$0xff]
        %v538 = vld [vmem:[%s356 + $0x170] sm:$0xff]
        %v539 = vld [vmem:[%s356 + $0x178] sm:$0xf]
        %v540 = vld [vmem:[%s356 + $0x17c] sm:$0xff]
        %v541 = vld [vmem:[%s356 + $0x184] sm:$0xff]
        %v542 = vld [vmem:[%s356 + $0x18c] sm:$0xf]
        %v543 = vld [vmem:[%s429] sm:$0xf]
        %v544 = vld [vmem:[%s429 + $0x4] sm:$0xf]
        %v545 = vld [vmem:[%s429 + $0x8] sm:$0xf]
        %v546 = vld [vmem:[%s429 + $0xc] sm:$0xf]
        %v547 = vld [vmem:[%s429 + $0x10] sm:$0xf]
        %v548 = vld [vmem:[%s429 + $0x14] sm:$0xf]
        %v549 = vld [vmem:[%s429 + $0x18] sm:$0xf]
        %v550 = vld [vmem:[%s429 + $0x1c] sm:$0xf]
        %v551 = vld [vmem:[%s429 + $0x20] sm:$0xf]
        %v552 = vld [vmem:[%s429 + $0x24] sm:$0xf]
        %v553 = vld [vmem:[%s429 + $0x28] sm:$0xf]
        %v554 = vld [vmem:[%s429 + $0x2c] sm:$0xf]
        %v555 = vld [vmem:[%s429 + $0x30] sm:$0xf]
        %v556 = vld [vmem:[%s429 + $0x34] sm:$0xf]
        %v557 = vld [vmem:[%s429 + $0x38] sm:$0xf]
        %v558 = vld [vmem:[%s429 + $0x3c] sm:$0xf]
        %v559 = vld [vmem:[%s429 + $0x40] sm:$0xf]
        %v560 = vld [vmem:[%s429 + $0x44] sm:$0xf]
        %v561 = vld [vmem:[%s429 + $0x48] sm:$0xf]
        %v562 = vld [vmem:[%s429 + $0x4c] sm:$0xf]
        %v563 = vld [vmem:[%s429 + $0x50] sm:$0xf]
        %v564 = vld [vmem:[%s429 + $0x54] sm:$0xf]
        %v565 = vld [vmem:[%s429 + $0x58] sm:$0xf]
        %v566 = vld [vmem:[%s429 + $0x5c] sm:$0xf]
        %v567 = vld [vmem:[%s429 + $0x60] sm:$0xf]
        %v568 = vld [vmem:[%s429 + $0x64] sm:$0xf]
        %v569 = vld [vmem:[%s429 + $0x68] sm:$0xf]
        %v570 = vld [vmem:[%s429 + $0x6c] sm:$0xf]
        %v571 = vld [vmem:[%s429 + $0x70] sm:$0xf]
        %v572 = vld [vmem:[%s429 + $0x74] sm:$0xf]
        %v573 = vld [vmem:[%s429 + $0x78] sm:$0xf]
        %v574 = vld [vmem:[%s429 + $0x7c] sm:$0xf]
        %v575 = vld [vmem:[%s429 + $0x80] sm:$0xf]
        %v576 = vld [vmem:[%s429 + $0x84] sm:$0xf]
        %v577 = vld [vmem:[%s429 + $0x88] sm:$0xf]
        %v578 = vld [vmem:[%s429 + $0x8c] sm:$0xf]
        %v579 = vld [vmem:[%s429 + $0x90] sm:$0xf]
        %v580 = vld [vmem:[%s429 + $0x94] sm:$0xf]
        %v581 = vld [vmem:[%s429 + $0x98] sm:$0xf]
        %v582 = vld [vmem:[%s429 + $0x9c] sm:$0xf]
        %v583 = vld [vmem:[%s429 + $0xa0] sm:$0xf]
        %v584 = vld [vmem:[%s429 + $0xa4] sm:$0xf]
        %v585 = vld [vmem:[%s429 + $0xa8] sm:$0xf]
        %v586 = vld [vmem:[%s429 + $0xac] sm:$0xf]
        %v587 = vld [vmem:[%s429 + $0xb0] sm:$0xf]
        %v588 = vld [vmem:[%s429 + $0xb4] sm:$0xf]
        %v589 = vld [vmem:[%s429 + $0xb8] sm:$0xf]
        %v590 = vld [vmem:[%s429 + $0xbc] sm:$0xf]
        %v591 = vld [vmem:[%s429 + $0xc0] sm:$0xf]
        %v592 = vld [vmem:[%s429 + $0xc4] sm:$0xf]
        %v593 = vld [vmem:[%s429 + $0xc8] sm:$0xf]
        %v594 = vld [vmem:[%s429 + $0xcc] sm:$0xf]
        %v595 = vld [vmem:[%s429 + $0xd0] sm:$0xf]
        %v596 = vld [vmem:[%s429 + $0xd4] sm:$0xf]
        %v597 = vld [vmem:[%s429 + $0xd8] sm:$0xf]
        %v598 = vld [vmem:[%s429 + $0xdc] sm:$0xf]
        %v599 = vld [vmem:[%s429 + $0xe0] sm:$0xf]
        %v600 = vld [vmem:[%s429 + $0xe4] sm:$0xf]
        %v601 = vld [vmem:[%s429 + $0xe8] sm:$0xf]
        %v602 = vld [vmem:[%s429 + $0xec] sm:$0xf]
        %v603 = vld [vmem:[%s429 + $0xf0] sm:$0xf]
        %v604 = vld [vmem:[%s429 + $0xf4] sm:$0xf]
        %v605 = vld [vmem:[%s429 + $0xf8] sm:$0xf]
        %v606 = vld [vmem:[%s429 + $0xfc] sm:$0xf]
        %v607 = vld [vmem:[%s429 + $0x100] sm:$0xf]
        %v608 = vld [vmem:[%s429 + $0x104] sm:$0xf]
        %v609 = vld [vmem:[%s429 + $0x108] sm:$0xf]
        %v610 = vld [vmem:[%s429 + $0x10c] sm:$0xf]
        %v611 = vld [vmem:[%s429 + $0x110] sm:$0xf]
        %v612 = vld [vmem:[%s429 + $0x114] sm:$0xf]
        %v613 = vld [vmem:[%s429 + $0x118] sm:$0xf]
        %v614 = vld [vmem:[%s429 + $0x11c] sm:$0xf]
        %v615 = vld [vmem:[%s429 + $0x120] sm:$0xf]
        %v616 = vld [vmem:[%s429 + $0x124] sm:$0xf]
        %v617 = vld [vmem:[%s429 + $0x128] sm:$0xf]
        %v618 = vld [vmem:[%s429 + $0x12c] sm:$0xf]
        %v619 = vld [vmem:[%s429 + $0x130] sm:$0xf]
        %v620 = vld [vmem:[%s429 + $0x134] sm:$0xf]
        %v621 = vld [vmem:[%s429 + $0x138] sm:$0xf]
        %v622 = vld [vmem:[%s429 + $0x13c] sm:$0xf]
        %v683 = vunpack.c.l.b16 %v483
        %v684 = vunpack.c.h.b16 %v483
        %v685 = vunpack.c.l.b16 %v484
        %v686 = vunpack.c.h.b16 %v484
        %v687 = vunpack.c.l.b16 %v485
        %v688 = vunpack.c.l.b16 %v486
        %v689 = vunpack.c.h.b16 %v486
        %v690 = vunpack.c.l.b16 %v487
        %v691 = vunpack.c.h.b16 %v487
        %v692 = vunpack.c.l.b16 %v488
        %v693 = vunpack.c.l.b16 %v489
        %v694 = vunpack.c.h.b16 %v489
        %v695 = vunpack.c.l.b16 %v490
        %v696 = vunpack.c.h.b16 %v490
        %v697 = vunpack.c.l.b16 %v491
        %v698 = vunpack.c.l.b16 %v492
        %v699 = vunpack.c.h.b16 %v492
        %v700 = vunpack.c.l.b16 %v493
        %v701 = vunpack.c.h.b16 %v493
        %v702 = vunpack.c.l.b16 %v494
        %v703 = vunpack.c.l.b16 %v495
        %v704 = vunpack.c.h.b16 %v495
        %v705 = vunpack.c.l.b16 %v496
        %v706 = vunpack.c.h.b16 %v496
        %v707 = vunpack.c.l.b16 %v497
        %v708 = vunpack.c.l.b16 %v498
        %v709 = vunpack.c.h.b16 %v498
        %v710 = vunpack.c.l.b16 %v499
        %v711 = vunpack.c.h.b16 %v499
        %v712 = vunpack.c.l.b16 %v500
        %v713 = vunpack.c.l.b16 %v501
        %v714 = vunpack.c.h.b16 %v501
        %v715 = vunpack.c.l.b16 %v502
        %v716 = vunpack.c.h.b16 %v502
        %v717 = vunpack.c.l.b16 %v503
        %v718 = vunpack.c.l.b16 %v504
        %v719 = vunpack.c.h.b16 %v504
        %v720 = vunpack.c.l.b16 %v505
        %v721 = vunpack.c.h.b16 %v505
        %v722 = vunpack.c.l.b16 %v506
        %v723 = vunpack.c.l.b16 %v507
        %v724 = vunpack.c.h.b16 %v507
        %v725 = vunpack.c.l.b16 %v508
        %v726 = vunpack.c.h.b16 %v508
        %v727 = vunpack.c.l.b16 %v509
        %v728 = vunpack.c.l.b16 %v510
        %v729 = vunpack.c.h.b16 %v510
        %v730 = vunpack.c.l.b16 %v511
        %v731 = vunpack.c.h.b16 %v511
        %v732 = vunpack.c.l.b16 %v512
        %v733 = vunpack.c.l.b16 %v513
        %v734 = vunpack.c.h.b16 %v513
        %v735 = vunpack.c.l.b16 %v514
        %v736 = vunpack.c.h.b16 %v514
        %v737 = vunpack.c.l.b16 %v515
        %v738 = vunpack.c.l.b16 %v516
        %v739 = vunpack.c.h.b16 %v516
        %v740 = vunpack.c.l.b16 %v517
        %v741 = vunpack.c.h.b16 %v517
        %v742 = vunpack.c.l.b16 %v518
        %v743 = vunpack.c.l.b16 %v519
        %v744 = vunpack.c.h.b16 %v519
        %v745 = vunpack.c.l.b16 %v520
        %v746 = vunpack.c.h.b16 %v520
        %v747 = vunpack.c.l.b16 %v521
        %v748 = vunpack.c.l.b16 %v522
        %v749 = vunpack.c.h.b16 %v522
        %v750 = vunpack.c.l.b16 %v523
        %v751 = vunpack.c.h.b16 %v523
        %v752 = vunpack.c.l.b16 %v524
        %v753 = vunpack.c.l.b16 %v525
        %v754 = vunpack.c.h.b16 %v525
        %v755 = vunpack.c.l.b16 %v526
        %v756 = vunpack.c.h.b16 %v526
        %v757 = vunpack.c.l.b16 %v527
        %v758 = vunpack.c.l.b16 %v528
        %v759 = vunpack.c.h.b16 %v528
        %v760 = vunpack.c.l.b16 %v529
        %v761 = vunpack.c.h.b16 %v529
        %v762 = vunpack.c.l.b16 %v530
        %v763 = vunpack.c.l.b16 %v531
        %v764 = vunpack.c.h.b16 %v531
        %v765 = vunpack.c.l.b16 %v532
        %v766 = vunpack.c.h.b16 %v532
        %v767 = vunpack.c.l.b16 %v533
        %v768 = vunpack.c.l.b16 %v534
        %v769 = vunpack.c.h.b16 %v534
        %v770 = vunpack.c.l.b16 %v535
        %v771 = vunpack.c.h.b16 %v535
        %v772 = vunpack.c.l.b16 %v536
        %v773 = vunpack.c.l.b16 %v537
        %v774 = vunpack.c.h.b16 %v537
        %v775 = vunpack.c.l.b16 %v538
        %v776 = vunpack.c.h.b16 %v538
        %v777 = vunpack.c.l.b16 %v539
        %v778 = vunpack.c.l.b16 %v540
        %v779 = vunpack.c.h.b16 %v540
        %v780 = vunpack.c.l.b16 %v541
        %v781 = vunpack.c.h.b16 %v541
        %v782 = vunpack.c.l.b16 %v542
        %v783 = vpack.c.b16 %v688, %v683
        %v784 = vpack.c.b16 %v689, %v684
        %v785 = vpack.c.b16 %v690, %v685
        %v786 = vpack.c.b16 %v691, %v686
        %v787 = vpack.c.b16 %v692, %v687
        %v788 = vpack.c.b16 %v698, %v693
        %v789 = vpack.c.b16 %v699, %v694
        %v790 = vpack.c.b16 %v700, %v695
        %v791 = vpack.c.b16 %v701, %v696
        %v792 = vpack.c.b16 %v702, %v697
        %v793 = vpack.c.b16 %v708, %v703
        %v794 = vpack.c.b16 %v709, %v704
        %v795 = vpack.c.b16 %v710, %v705
        %v796 = vpack.c.b16 %v711, %v706
        %v797 = vpack.c.b16 %v712, %v707
        %v798 = vpack.c.b16 %v718, %v713
        %v799 = vpack.c.b16 %v719, %v714
        %v800 = vpack.c.b16 %v720, %v715
        %v801 = vpack.c.b16 %v721, %v716
        %v802 = vpack.c.b16 %v722, %v717
        %v803 = vpack.c.b16 %v728, %v723
        %v804 = vpack.c.b16 %v729, %v724
        %v805 = vpack.c.b16 %v730, %v725
        %v806 = vpack.c.b16 %v731, %v726
        %v807 = vpack.c.b16 %v732, %v727
        %v808 = vpack.c.b16 %v738, %v733
        %v809 = vpack.c.b16 %v739, %v734
        %v810 = vpack.c.b16 %v740, %v735
        %v811 = vpack.c.b16 %v741, %v736
        %v812 = vpack.c.b16 %v742, %v737
        %v813 = vpack.c.b16 %v748, %v743
        %v814 = vpack.c.b16 %v749, %v744
        %v815 = vpack.c.b16 %v750, %v745
        %v816 = vpack.c.b16 %v751, %v746
        %v817 = vpack.c.b16 %v752, %v747
        %v818 = vpack.c.b16 %v758, %v753
        %v819 = vpack.c.b16 %v759, %v754
        %v820 = vpack.c.b16 %v760, %v755
        %v821 = vpack.c.b16 %v761, %v756
        %v822 = vpack.c.b16 %v762, %v757
        %v823 = vpack.c.b16 %v768, %v763
        %v824 = vpack.c.b16 %v769, %v764
        %v825 = vpack.c.b16 %v770, %v765
        %v826 = vpack.c.b16 %v771, %v766
        %v827 = vpack.c.b16 %v772, %v767
        %v828 = vpack.c.b16 %v778, %v773
        %v829 = vpack.c.b16 %v779, %v774
        %v830 = vpack.c.b16 %v780, %v775
        %v831 = vpack.c.b16 %v781, %v776
        %v832 = vpack.c.b16 %v782, %v777
        %v963 = vunpack.c.l.b16 %v543
        %v964 = vunpack.c.l.b16 %v544
        %v965 = vunpack.c.l.b16 %v545
        %v966 = vunpack.c.l.b16 %v546
        %v967 = vunpack.c.l.b16 %v547
        %v968 = vunpack.c.l.b16 %v548
        %v969 = vunpack.c.l.b16 %v549
        %v970 = vunpack.c.l.b16 %v550
        %v971 = vunpack.c.l.b16 %v551
        %v972 = vunpack.c.l.b16 %v552
        %v973 = vunpack.c.l.b16 %v553
        %v974 = vunpack.c.l.b16 %v554
        %v975 = vunpack.c.l.b16 %v555
        %v976 = vunpack.c.l.b16 %v556
        %v977 = vunpack.c.l.b16 %v557
        %v978 = vunpack.c.l.b16 %v558
        %v979 = vunpack.c.l.b16 %v559
        %v980 = vunpack.c.l.b16 %v560
        %v981 = vunpack.c.l.b16 %v561
        %v982 = vunpack.c.l.b16 %v562
        %v983 = vunpack.c.l.b16 %v563
        %v984 = vunpack.c.l.b16 %v564
        %v985 = vunpack.c.l.b16 %v565
        %v986 = vunpack.c.l.b16 %v566
        %v987 = vunpack.c.l.b16 %v567
        %v988 = vunpack.c.l.b16 %v568
        %v989 = vunpack.c.l.b16 %v569
        %v990 = vunpack.c.l.b16 %v570
        %v991 = vunpack.c.l.b16 %v571
        %v992 = vunpack.c.l.b16 %v572
        %v993 = vunpack.c.l.b16 %v573
        %v994 = vunpack.c.l.b16 %v574
        %v995 = vunpack.c.l.b16 %v575
        %v996 = vunpack.c.l.b16 %v576
        %v997 = vunpack.c.l.b16 %v577
        %v998 = vunpack.c.l.b16 %v578
        %v999 = vunpack.c.l.b16 %v579
        %v1000 = vunpack.c.l.b16 %v580
        %v1001 = vunpack.c.l.b16 %v581
        %v1002 = vunpack.c.l.b16 %v582
        %v1003 = vunpack.c.l.b16 %v583
        %v1004 = vunpack.c.l.b16 %v584
        %v1005 = vunpack.c.l.b16 %v585
        %v1006 = vunpack.c.l.b16 %v586
        %v1007 = vunpack.c.l.b16 %v587
        %v1008 = vunpack.c.l.b16 %v588
        %v1009 = vunpack.c.l.b16 %v589
        %v1010 = vunpack.c.l.b16 %v590
        %v1011 = vunpack.c.l.b16 %v591
        %v1012 = vunpack.c.l.b16 %v592
        %v1013 = vunpack.c.l.b16 %v593
        %v1014 = vunpack.c.l.b16 %v594
        %v1015 = vunpack.c.l.b16 %v595
        %v1016 = vunpack.c.l.b16 %v596
        %v1017 = vunpack.c.l.b16 %v597
        %v1018 = vunpack.c.l.b16 %v598
        %v1019 = vunpack.c.l.b16 %v599
        %v1020 = vunpack.c.l.b16 %v600
        %v1021 = vunpack.c.l.b16 %v601
        %v1022 = vunpack.c.l.b16 %v602
        %v1023 = vunpack.c.l.b16 %v603
        %v1024 = vunpack.c.l.b16 %v604
        %v1025 = vunpack.c.l.b16 %v605
        %v1026 = vunpack.c.l.b16 %v606
        %v1027 = vunpack.c.l.b16 %v607
        %v1028 = vunpack.c.l.b16 %v608
        %v1029 = vunpack.c.l.b16 %v609
        %v1030 = vunpack.c.l.b16 %v610
        %v1031 = vunpack.c.l.b16 %v611
        %v1032 = vunpack.c.l.b16 %v612
        %v1033 = vunpack.c.l.b16 %v613
        %v1034 = vunpack.c.l.b16 %v614
        %v1035 = vunpack.c.l.b16 %v615
        %v1036 = vunpack.c.l.b16 %v616
        %v1037 = vunpack.c.l.b16 %v617
        %v1038 = vunpack.c.l.b16 %v618
        %v1039 = vunpack.c.l.b16 %v619
        %v1040 = vunpack.c.l.b16 %v620
        %v1041 = vunpack.c.l.b16 %v621
        %v1042 = vunpack.c.l.b16 %v622
        %v1043 = vpack.c.b16 %v964, %v963
        %v1044 = vpack.c.b16 %v966, %v965
        %v1045 = vpack.c.b16 %v968, %v967
        %v1046 = vpack.c.b16 %v970, %v969
        %v1047 = vpack.c.b16 %v972, %v971
        %v1048 = vpack.c.b16 %v974, %v973
        %v1049 = vpack.c.b16 %v976, %v975
        %v1050 = vpack.c.b16 %v978, %v977
        %v1051 = vpack.c.b16 %v980, %v979
        %v1052 = vpack.c.b16 %v982, %v981
        %v1053 = vpack.c.b16 %v984, %v983
        %v1054 = vpack.c.b16 %v986, %v985
        %v1055 = vpack.c.b16 %v988, %v987
        %v1056 = vpack.c.b16 %v990, %v989
        %v1057 = vpack.c.b16 %v992, %v991
        %v1058 = vpack.c.b16 %v994, %v993
        %v1059 = vpack.c.b16 %v996, %v995
        %v1060 = vpack.c.b16 %v998, %v997
        %v1061 = vpack.c.b16 %v1000, %v999
        %v1062 = vpack.c.b16 %v1002, %v1001
        %v1063 = vpack.c.b16 %v1004, %v1003
        %v1064 = vpack.c.b16 %v1006, %v1005
        %v1065 = vpack.c.b16 %v1008, %v1007
        %v1066 = vpack.c.b16 %v1010, %v1009
        %v1067 = vpack.c.b16 %v1012, %v1011
        %v1068 = vpack.c.b16 %v1014, %v1013
        %v1069 = vpack.c.b16 %v1016, %v1015
        %v1070 = vpack.c.b16 %v1018, %v1017
        %v1071 = vpack.c.b16 %v1020, %v1019
        %v1072 = vpack.c.b16 %v1022, %v1021
        %v1073 = vpack.c.b16 %v1024, %v1023
        %v1074 = vpack.c.b16 %v1026, %v1025
        %v1075 = vpack.c.b16 %v1028, %v1027
        %v1076 = vpack.c.b16 %v1030, %v1029
        %v1077 = vpack.c.b16 %v1032, %v1031
        %v1078 = vpack.c.b16 %v1034, %v1033
        %v1079 = vpack.c.b16 %v1036, %v1035
        %v1080 = vpack.c.b16 %v1038, %v1037
        %v1081 = vpack.c.b16 %v1040, %v1039
        %v1082 = vpack.c.b16 %v1042, %v1041
        %1123 = vmatpush.bf16.msra.mxu0 %v1050
        %1124 = vmatpush.bf16.msra.mxu0 %v1049
        %1125 = vmatpush.bf16.msra.mxu0 %v1048
        %1126 = vmatpush.bf16.msra.mxu0 %v1047
        %1127 = vmatpush.bf16.msra.mxu0 %v1046
        %1128 = vmatpush.bf16.msra.mxu0 %v1045
        %1129 = vmatpush.bf16.msra.mxu0 %v1044
        %1130 = vmatpush.bf16.msra.mxu0 %v1043
        %1131 = vmatmul.bf16.gmra.mxu0 %v783
        %v1132 = vpop.f32.mrf.mxu0
        %v1133 = vadd.f32 0.0, %v1132
        %v1134 = vpop.f32.mrf.mxu0
        %v1135 = vadd.f32 0.0, %v1134
        %1136 = vmatmul.bf16.gmra.mxu0 %v788
        %v1137 = vpop.f32.mrf.mxu0
        %v1138 = vadd.f32 0.0, %v1137
        %v1139 = vpop.f32.mrf.mxu0
        %v1140 = vadd.f32 0.0, %v1139
        %1141 = vmatmul.bf16.gmra.mxu0 %v793
        %v1142 = vpop.f32.mrf.mxu0
        %v1143 = vadd.f32 0.0, %v1142
        %v1144 = vpop.f32.mrf.mxu0
        %v1145 = vadd.f32 0.0, %v1144
        %1146 = vmatmul.bf16.gmra.mxu0 %v798
        %v1147 = vpop.f32.mrf.mxu0
        %v1148 = vadd.f32 0.0, %v1147
        %v1149 = vpop.f32.mrf.mxu0
        %v1150 = vadd.f32 0.0, %v1149
        %1151 = vmatmul.bf16.gmra.mxu0 %v803
        %v1152 = vpop.f32.mrf.mxu0
        %v1153 = vadd.f32 0.0, %v1152
        %v1154 = vpop.f32.mrf.mxu0
        %v1155 = vadd.f32 0.0, %v1154
        %1156 = vmatmul.bf16.gmra.mxu0 %v808
        %v1157 = vpop.f32.mrf.mxu0
        %v1158 = vadd.f32 0.0, %v1157
        %v1159 = vpop.f32.mrf.mxu0
        %v1160 = vadd.f32 0.0, %v1159
        %1161 = vmatmul.bf16.gmra.mxu0 %v813
        %v1162 = vpop.f32.mrf.mxu0
        %v1163 = vadd.f32 0.0, %v1162
        %v1164 = vpop.f32.mrf.mxu0
        %v1165 = vadd.f32 0.0, %v1164
        %1166 = vmatmul.bf16.gmra.mxu0 %v818
        %v1167 = vpop.f32.mrf.mxu0
        %v1168 = vadd.f32 0.0, %v1167
        %v1169 = vpop.f32.mrf.mxu0
        %v1170 = vadd.f32 0.0, %v1169
        %1171 = vmatmul.bf16.gmra.mxu0 %v823
        %v1172 = vpop.f32.mrf.mxu0
        %v1173 = vadd.f32 0.0, %v1172
        %v1174 = vpop.f32.mrf.mxu0
        %v1175 = vadd.f32 0.0, %v1174
        %1176 = vmatmul.bf16.gmra.mxu0 %v828
        %v1177 = vpop.f32.mrf.mxu0
        %v1178 = vadd.f32 0.0, %v1177
        %v1179 = vpop.f32.mrf.mxu0
        %v1180 = vadd.f32 0.0, %v1179
        %1181 = vdwg.mxu0
        %1182 = vmatpush.bf16.msra.mxu0 %v1058
        %1183 = vmatpush.bf16.msra.mxu0 %v1057
        %1184 = vmatpush.bf16.msra.mxu0 %v1056
        %1185 = vmatpush.bf16.msra.mxu0 %v1055
        %1186 = vmatpush.bf16.msra.mxu0 %v1054
        %1187 = vmatpush.bf16.msra.mxu0 %v1053
        %1188 = vmatpush.bf16.msra.mxu0 %v1052
        %1189 = vmatpush.bf16.msra.mxu0 %v1051
        %1190 = vmatmul.bf16.gmra.mxu0 %v784
        %v1191 = vpop.f32.mrf.mxu0
        %v1192 = vadd.f32 %v1133, %v1191
        %v1193 = vpop.f32.mrf.mxu0
        %v1194 = vadd.f32 %v1135, %v1193
        %1195 = vmatmul.bf16.gmra.mxu0 %v789
        %v1196 = vpop.f32.mrf.mxu0
        %v1197 = vadd.f32 %v1138, %v1196
        %v1198 = vpop.f32.mrf.mxu0
        %v1199 = vadd.f32 %v1140, %v1198
        %1200 = vmatmul.bf16.gmra.mxu0 %v794
        %v1201 = vpop.f32.mrf.mxu0
        %v1202 = vadd.f32 %v1143, %v1201
        %v1203 = vpop.f32.mrf.mxu0
        %v1204 = vadd.f32 %v1145, %v1203
        %1205 = vmatmul.bf16.gmra.mxu0 %v799
        %v1206 = vpop.f32.mrf.mxu0
        %v1207 = vadd.f32 %v1148, %v1206
        %v1208 = vpop.f32.mrf.mxu0
        %v1209 = vadd.f32 %v1150, %v1208
        %1210 = vmatmul.bf16.gmra.mxu0 %v804
        %v1211 = vpop.f32.mrf.mxu0
        %v1212 = vadd.f32 %v1153, %v1211
        %v1213 = vpop.f32.mrf.mxu0
        %v1214 = vadd.f32 %v1155, %v1213
        %1215 = vmatmul.bf16.gmra.mxu0 %v809
        %v1216 = vpop.f32.mrf.mxu0
        %v1217 = vadd.f32 %v1158, %v1216
        %v1218 = vpop.f32.mrf.mxu0
        %v1219 = vadd.f32 %v1160, %v1218
        %1220 = vmatmul.bf16.gmra.mxu0 %v814
        %v1221 = vpop.f32.mrf.mxu0
        %v1222 = vadd.f32 %v1163, %v1221
        %v1223 = vpop.f32.mrf.mxu0
        %v1224 = vadd.f32 %v1165, %v1223
        %1225 = vmatmul.bf16.gmra.mxu0 %v819
        %v1226 = vpop.f32.mrf.mxu0
        %v1227 = vadd.f32 %v1168, %v1226
        %v1228 = vpop.f32.mrf.mxu0
        %v1229 = vadd.f32 %v1170, %v1228
        %1230 = vmatmul.bf16.gmra.mxu0 %v824
        %v1231 = vpop.f32.mrf.mxu0
        %v1232 = vadd.f32 %v1173, %v1231
        %v1233 = vpop.f32.mrf.mxu0
        %v1234 = vadd.f32 %v1175, %v1233
        %1235 = vmatmul.bf16.gmra.mxu0 %v829
        %v1236 = vpop.f32.mrf.mxu0
        %v1237 = vadd.f32 %v1178, %v1236
        %v1238 = vpop.f32.mrf.mxu0
        %v1239 = vadd.f32 %v1180, %v1238
        %1240 = vdwg.mxu0
        %1241 = vmatpush.bf16.msra.mxu0 %v1066
        %1242 = vmatpush.bf16.msra.mxu0 %v1065
        %1243 = vmatpush.bf16.msra.mxu0 %v1064
        %1244 = vmatpush.bf16.msra.mxu0 %v1063
        %1245 = vmatpush.bf16.msra.mxu0 %v1062
        %1246 = vmatpush.bf16.msra.mxu0 %v1061
        %1247 = vmatpush.bf16.msra.mxu0 %v1060
        %1248 = vmatpush.bf16.msra.mxu0 %v1059
        %1249 = vmatmul.bf16.gmra.mxu0 %v785
        %v1250 = vpop.f32.mrf.mxu0
        %v1251 = vadd.f32 %v1192, %v1250
        %v1252 = vpop.f32.mrf.mxu0
        %v1253 = vadd.f32 %v1194, %v1252
        %1254 = vmatmul.bf16.gmra.mxu0 %v790
        %v1255 = vpop.f32.mrf.mxu0
        %v1256 = vadd.f32 %v1197, %v1255
        %v1257 = vpop.f32.mrf.mxu0
        %v1258 = vadd.f32 %v1199, %v1257
        %1259 = vmatmul.bf16.gmra.mxu0 %v795
        %v1260 = vpop.f32.mrf.mxu0
        %v1261 = vadd.f32 %v1202, %v1260
        %v1262 = vpop.f32.mrf.mxu0
        %v1263 = vadd.f32 %v1204, %v1262
        %1264 = vmatmul.bf16.gmra.mxu0 %v800
        %v1265 = vpop.f32.mrf.mxu0
        %v1266 = vadd.f32 %v1207, %v1265
        %v1267 = vpop.f32.mrf.mxu0
        %v1268 = vadd.f32 %v1209, %v1267
        %1269 = vmatmul.bf16.gmra.mxu0 %v805
        %v1270 = vpop.f32.mrf.mxu0
        %v1271 = vadd.f32 %v1212, %v1270
        %v1272 = vpop.f32.mrf.mxu0
        %v1273 = vadd.f32 %v1214, %v1272
        %1274 = vmatmul.bf16.gmra.mxu0 %v810
        %v1275 = vpop.f32.mrf.mxu0
        %v1276 = vadd.f32 %v1217, %v1275
        %v1277 = vpop.f32.mrf.mxu0
        %v1278 = vadd.f32 %v1219, %v1277
        %1279 = vmatmul.bf16.gmra.mxu0 %v815
        %v1280 = vpop.f32.mrf.mxu0
        %v1281 = vadd.f32 %v1222, %v1280
        %v1282 = vpop.f32.mrf.mxu0
        %v1283 = vadd.f32 %v1224, %v1282
        %1284 = vmatmul.bf16.gmra.mxu0 %v820
        %v1285 = vpop.f32.mrf.mxu0
        %v1286 = vadd.f32 %v1227, %v1285
        %v1287 = vpop.f32.mrf.mxu0
        %v1288 = vadd.f32 %v1229, %v1287
        %1289 = vmatmul.bf16.gmra.mxu0 %v825
        %v1290 = vpop.f32.mrf.mxu0
        %v1291 = vadd.f32 %v1232, %v1290
        %v1292 = vpop.f32.mrf.mxu0
        %v1293 = vadd.f32 %v1234, %v1292
        %1294 = vmatmul.bf16.gmra.mxu0 %v830
        %v1295 = vpop.f32.mrf.mxu0
        %v1296 = vadd.f32 %v1237, %v1295
        %v1297 = vpop.f32.mrf.mxu0
        %v1298 = vadd.f32 %v1239, %v1297
        %1299 = vdwg.mxu0
        %1300 = vmatpush.bf16.msra.mxu0 %v1074
        %1301 = vmatpush.bf16.msra.mxu0 %v1073
        %1302 = vmatpush.bf16.msra.mxu0 %v1072
        %1303 = vmatpush.bf16.msra.mxu0 %v1071
        %1304 = vmatpush.bf16.msra.mxu0 %v1070
        %1305 = vmatpush.bf16.msra.mxu0 %v1069
        %1306 = vmatpush.bf16.msra.mxu0 %v1068
        %1307 = vmatpush.bf16.msra.mxu0 %v1067
        %1308 = vmatmul.bf16.gmra.mxu0 %v786
        %v1309 = vpop.f32.mrf.mxu0
        %v1310 = vadd.f32 %v1251, %v1309
        %v1311 = vpop.f32.mrf.mxu0
        %v1312 = vadd.f32 %v1253, %v1311
        %1313 = vmatmul.bf16.gmra.mxu0 %v791
        %v1314 = vpop.f32.mrf.mxu0
        %v1315 = vadd.f32 %v1256, %v1314
        %v1316 = vpop.f32.mrf.mxu0
        %v1317 = vadd.f32 %v1258, %v1316
        %1318 = vmatmul.bf16.gmra.mxu0 %v796
        %v1319 = vpop.f32.mrf.mxu0
        %v1320 = vadd.f32 %v1261, %v1319
        %v1321 = vpop.f32.mrf.mxu0
        %v1322 = vadd.f32 %v1263, %v1321
        %1323 = vmatmul.bf16.gmra.mxu0 %v801
        %v1324 = vpop.f32.mrf.mxu0
        %v1325 = vadd.f32 %v1266, %v1324
        %v1326 = vpop.f32.mrf.mxu0
        %v1327 = vadd.f32 %v1268, %v1326
        %1328 = vmatmul.bf16.gmra.mxu0 %v806
        %v1329 = vpop.f32.mrf.mxu0
        %v1330 = vadd.f32 %v1271, %v1329
        %v1331 = vpop.f32.mrf.mxu0
        %v1332 = vadd.f32 %v1273, %v1331
        %1333 = vmatmul.bf16.gmra.mxu0 %v811
        %v1334 = vpop.f32.mrf.mxu0
        %v1335 = vadd.f32 %v1276, %v1334
        %v1336 = vpop.f32.mrf.mxu0
        %v1337 = vadd.f32 %v1278, %v1336
        %1338 = vmatmul.bf16.gmra.mxu0 %v816
        %v1339 = vpop.f32.mrf.mxu0
        %v1340 = vadd.f32 %v1281, %v1339
        %v1341 = vpop.f32.mrf.mxu0
        %v1342 = vadd.f32 %v1283, %v1341
        %1343 = vmatmul.bf16.gmra.mxu0 %v821
        %v1344 = vpop.f32.mrf.mxu0
        %v1345 = vadd.f32 %v1286, %v1344
        %v1346 = vpop.f32.mrf.mxu0
        %v1347 = vadd.f32 %v1288, %v1346
        %1348 = vmatmul.bf16.gmra.mxu0 %v826
        %v1349 = vpop.f32.mrf.mxu0
        %v1350 = vadd.f32 %v1291, %v1349
        %v1351 = vpop.f32.mrf.mxu0
        %v1352 = vadd.f32 %v1293, %v1351
        %1353 = vmatmul.bf16.gmra.mxu0 %v831
        %v1354 = vpop.f32.mrf.mxu0
        %v1355 = vadd.f32 %v1296, %v1354
        %v1356 = vpop.f32.mrf.mxu0
        %v1357 = vadd.f32 %v1298, %v1356
        %1358 = vdwg.mxu0
        %1359 = vmatpush.bf16.msra.mxu0 %v1082
        %1360 = vmatpush.bf16.msra.mxu0 %v1081
        %1361 = vmatpush.bf16.msra.mxu0 %v1080
        %1362 = vmatpush.bf16.msra.mxu0 %v1079
        %1363 = vmatpush.bf16.msra.mxu0 %v1078
        %1364 = vmatpush.bf16.msra.mxu0 %v1077
        %1365 = vmatpush.bf16.msra.mxu0 %v1076
        %1366 = vmatpush.bf16.msra.mxu0 %v1075
        %1367 = vmatmul.bf16.gmra.mxu0 %v787
        %v1368 = vpop.f32.mrf.mxu0
        %v1369 = vadd.f32 %v1310, %v1368
        %v1370 = vpop.f32.mrf.mxu0
        %v1371 = vadd.f32 %v1312, %v1370
        %1372 = vmatmul.bf16.gmra.mxu0 %v792
        %v1373 = vpop.f32.mrf.mxu0
        %v1374 = vadd.f32 %v1315, %v1373
        %v1375 = vpop.f32.mrf.mxu0
        %v1376 = vadd.f32 %v1317, %v1375
        %1377 = vmatmul.bf16.gmra.mxu0 %v797
        %v1378 = vpop.f32.mrf.mxu0
        %v1379 = vadd.f32 %v1320, %v1378
        %v1380 = vpop.f32.mrf.mxu0
        %v1381 = vadd.f32 %v1322, %v1380
        %1382 = vmatmul.bf16.gmra.mxu0 %v802
        %v1383 = vpop.f32.mrf.mxu0
        %v1384 = vadd.f32 %v1325, %v1383
        %v1385 = vpop.f32.mrf.mxu0
        %v1386 = vadd.f32 %v1327, %v1385
        %1387 = vmatmul.bf16.gmra.mxu0 %v807
        %v1388 = vpop.f32.mrf.mxu0
        %v1389 = vadd.f32 %v1330, %v1388
        %v1390 = vpop.f32.mrf.mxu0
        %v1391 = vadd.f32 %v1332, %v1390
        %1392 = vmatmul.bf16.gmra.mxu0 %v812
        %v1393 = vpop.f32.mrf.mxu0
        %v1394 = vadd.f32 %v1335, %v1393
        %v1395 = vpop.f32.mrf.mxu0
        %v1396 = vadd.f32 %v1337, %v1395
        %1397 = vmatmul.bf16.gmra.mxu0 %v817
        %v1398 = vpop.f32.mrf.mxu0
        %v1399 = vadd.f32 %v1340, %v1398
        %v1400 = vpop.f32.mrf.mxu0
        %v1401 = vadd.f32 %v1342, %v1400
        %1402 = vmatmul.bf16.gmra.mxu0 %v822
        %v1403 = vpop.f32.mrf.mxu0
        %v1404 = vadd.f32 %v1345, %v1403
        %v1405 = vpop.f32.mrf.mxu0
        %v1406 = vadd.f32 %v1347, %v1405
        %1407 = vmatmul.bf16.gmra.mxu0 %v827
        %v1408 = vpop.f32.mrf.mxu0
        %v1409 = vadd.f32 %v1350, %v1408
        %v1410 = vpop.f32.mrf.mxu0
        %v1411 = vadd.f32 %v1352, %v1410
        %1412 = vmatmul.bf16.gmra.mxu0 %v832
        %v1413 = vpop.f32.mrf.mxu0
        %v1414 = vadd.f32 %v1355, %v1413
        %v1415 = vpop.f32.mrf.mxu0
        %v1416 = vadd.f32 %v1357, %v1415
        %1417 = vdwg.mxu0
        %v1418 = vadd.f32 %v463, %v1369
        %v1419 = vadd.f32 %v464, %v1371
        %v1420 = vadd.f32 %v465, %v1374
        %v1421 = vadd.f32 %v466, %v1376
        %v1422 = vadd.f32 %v467, %v1379
        %v1423 = vadd.f32 %v468, %v1381
        %v1424 = vadd.f32 %v469, %v1384
        %v1425 = vadd.f32 %v470, %v1386
        %v1426 = vadd.f32 %v471, %v1389
        %v1427 = vadd.f32 %v472, %v1391
        %v1428 = vadd.f32 %v473, %v1394
        %v1429 = vadd.f32 %v474, %v1396
        %v1430 = vadd.f32 %v475, %v1399
        %v1431 = vadd.f32 %v476, %v1401
        %v1432 = vadd.f32 %v477, %v1404
        %v1433 = vadd.f32 %v478, %v1406
        %v1434 = vadd.f32 %v479, %v1409
        %v1435 = vadd.f32 %v480, %v1411
        %v1436 = vadd.f32 %v481, %v1414
        %v1437 = vadd.f32 %v482, %v1416
        %1438 = vst [vmem:[#allocation2] sm:$0xff] %v1418
        %1439 = vst [vmem:[#allocation2 + $0x8] sm:$0xff] %v1419
        %1440 = vst [vmem:[#allocation2 + $0x10] sm:$0xff] %v1420
        %1441 = vst [vmem:[#allocation2 + $0x18] sm:$0xff] %v1421
        %1442 = vst [vmem:[#allocation2 + $0x20] sm:$0xff] %v1422
        %1443 = vst [vmem:[#allocation2 + $0x28] sm:$0xff] %v1423
        %1444 = vst [vmem:[#allocation2 + $0x30] sm:$0xff] %v1424
        %1445 = vst [vmem:[#allocation2 + $0x38] sm:$0xff] %v1425
        %1446 = vst [vmem:[#allocation2 + $0x40] sm:$0xff] %v1426
        %1447 = vst [vmem:[#allocation2 + $0x48] sm:$0xff] %v1427
        %1448 = vst [vmem:[#allocation2 + $0x50] sm:$0xff] %v1428
        %1449 = vst [vmem:[#allocation2 + $0x58] sm:$0xff] %v1429
        %1450 = vst [vmem:[#allocation2 + $0x60] sm:$0xff] %v1430
        %1451 = vst [vmem:[#allocation2 + $0x68] sm:$0xff] %v1431
        %1452 = vst [vmem:[#allocation2 + $0x70] sm:$0xff] %v1432
        %1453 = vst [vmem:[#allocation2 + $0x78] sm:$0xff] %v1433
        %1454 = vst [vmem:[#allocation2 + $0x80] sm:$0xff] %v1434
        %1455 = vst [vmem:[#allocation2 + $0x88] sm:$0xff] %v1435
        %1456 = vst [vmem:[#allocation2 + $0x90] sm:$0xff] %v1436
        %1457 = vst [vmem:[#allocation2 + $0x98] sm:$0xff] %v1437
        // Predicated region
        $region69: #{tpu_custom_call.1} parent=47 // pred_check
          %p1458 = pneg %p439
        $region70: #{tpu_custom_call.1} parent=47 // pred_check_branch
          %1460 = sbr.rel (%p1458) target = $region72
        $region71: #{tpu_custom_call.1} parent=47 // pred_region
          %v1461 = vld [vmem:[#allocation2] sm:$0xff]
          %v1462 = vld [vmem:[#allocation2 + $0x8] sm:$0xff]
          %v1463 = vld [vmem:[#allocation2 + $0x10] sm:$0xff]
          %v1464 = vld [vmem:[#allocation2 + $0x18] sm:$0xff]
          %v1465 = vld [vmem:[#allocation2 + $0x20] sm:$0xff]
          %v1466 = vld [vmem:[#allocation2 + $0x28] sm:$0xff]
          %v1467 = vld [vmem:[#allocation2 + $0x30] sm:$0xff]
          %v1468 = vld [vmem:[#allocation2 + $0x38] sm:$0xff]
          %v1469 = vld [vmem:[#allocation2 + $0x40] sm:$0xff]
          %v1470 = vld [vmem:[#allocation2 + $0x48] sm:$0xff]
          %v1471 = vld [vmem:[#allocation2 + $0x50] sm:$0xff]
          %v1472 = vld [vmem:[#allocation2 + $0x58] sm:$0xff]
          %v1473 = vld [vmem:[#allocation2 + $0x60] sm:$0xff]
          %v1474 = vld [vmem:[#allocation2 + $0x68] sm:$0xff]
          %v1475 = vld [vmem:[#allocation2 + $0x70] sm:$0xff]
          %v1476 = vld [vmem:[#allocation2 + $0x78] sm:$0xff]
          %v1477 = vld [vmem:[#allocation2 + $0x80] sm:$0xff]
          %v1478 = vld [vmem:[#allocation2 + $0x88] sm:$0xff]
          %v1479 = vld [vmem:[#allocation2 + $0x90] sm:$0xff]
          %v1480 = vld [vmem:[#allocation2 + $0x98] sm:$0xff]
          %v1481 = vpack.c.bf16 %v1462, %v1461
          %v1482 = vpack.c.bf16 %v1464, %v1463
          %v1483 = vpack.c.bf16 %v1466, %v1465
          %v1484 = vpack.c.bf16 %v1468, %v1467
          %v1485 = vpack.c.bf16 %v1470, %v1469
          %v1486 = vpack.c.bf16 %v1472, %v1471
          %v1487 = vpack.c.bf16 %v1474, %v1473
          %v1488 = vpack.c.bf16 %v1476, %v1475
          %v1489 = vpack.c.bf16 %v1478, %v1477
          %v1490 = vpack.c.bf16 %v1480, %v1479
          %v1491 = vld [vmem:[#allocation8] sm:$0xff]
          %v1492 = vld [vmem:[#allocation8 + $0x8] sm:$0xff]
          %v1493 = vld [vmem:[#allocation8 + $0x10] sm:$0xff]
          %v1494 = vld [vmem:[#allocation8 + $0x18] sm:$0xff]
          %v1495 = vld [vmem:[#allocation8 + $0x20] sm:$0xff]
          %v1496 = vld [vmem:[#allocation8 + $0x28] sm:$0xff]
          %v1497 = vld [vmem:[#allocation8 + $0x30] sm:$0xff]
          %v1498 = vld [vmem:[#allocation8 + $0x38] sm:$0xff]
          %v1499 = vld [vmem:[#allocation8 + $0x40] sm:$0xff]
          %v1500 = vld [vmem:[#allocation8 + $0x48] sm:$0xff]
          %v1501 = vld [vmem:[#allocation8 + $0x50] sm:$0xff]
          %v1502 = vld [vmem:[#allocation8 + $0x58] sm:$0xff]
          %v1503 = vld [vmem:[#allocation8 + $0x60] sm:$0xff]
          %v1504 = vld [vmem:[#allocation8 + $0x68] sm:$0xff]
          %v1505 = vld [vmem:[#allocation8 + $0x70] sm:$0xff]
          %v1506 = vld [vmem:[#allocation8 + $0x78] sm:$0xff]
          %v1523 = vunpack.c.l.b16 %v1491
          %v1524 = vunpack.c.h.b16 %v1491
          %v1525 = vunpack.c.l.b16 %v1492
          %v1526 = vunpack.c.h.b16 %v1492
          %v1527 = vunpack.c.l.b16 %v1493
          %v1528 = vunpack.c.h.b16 %v1493
          %v1529 = vunpack.c.l.b16 %v1494
          %v1530 = vunpack.c.h.b16 %v1494
          %v1531 = vunpack.c.l.b16 %v1495
          %v1532 = vunpack.c.h.b16 %v1495
          %v1533 = vunpack.c.l.b16 %v1496
          %v1534 = vunpack.c.h.b16 %v1496
          %v1535 = vunpack.c.l.b16 %v1497
          %v1536 = vunpack.c.h.b16 %v1497
          %v1537 = vunpack.c.l.b16 %v1498
          %v1538 = vunpack.c.h.b16 %v1498
          %v1539 = vunpack.c.l.b16 %v1499
          %v1540 = vunpack.c.h.b16 %v1499
          %v1541 = vunpack.c.l.b16 %v1500
          %v1542 = vunpack.c.h.b16 %v1500
          %v1543 = vunpack.c.l.b16 %v1501
          %v1544 = vunpack.c.h.b16 %v1501
          %v1545 = vunpack.c.l.b16 %v1502
          %v1546 = vunpack.c.h.b16 %v1502
          %v1547 = vunpack.c.l.b16 %v1503
          %v1548 = vunpack.c.h.b16 %v1503
          %v1549 = vunpack.c.l.b16 %v1504
          %v1550 = vunpack.c.h.b16 %v1504
          %v1551 = vunpack.c.l.b16 %v1505
          %v1552 = vunpack.c.h.b16 %v1505
          %v1553 = vunpack.c.l.b16 %v1506
          %v1554 = vunpack.c.h.b16 %v1506
          %v1555 = vpack.c.b16 %v1525, %v1523
          %v1556 = vpack.c.b16 %v1526, %v1524
          %v1557 = vpack.c.b16 %v1529, %v1527
          %v1558 = vpack.c.b16 %v1530, %v1528
          %v1559 = vpack.c.b16 %v1533, %v1531
          %v1560 = vpack.c.b16 %v1534, %v1532
          %v1561 = vpack.c.b16 %v1537, %v1535
          %v1562 = vpack.c.b16 %v1538, %v1536
          %v1563 = vpack.c.b16 %v1541, %v1539
          %v1564 = vpack.c.b16 %v1542, %v1540
          %v1565 = vpack.c.b16 %v1545, %v1543
          %v1566 = vpack.c.b16 %v1546, %v1544
          %v1567 = vpack.c.b16 %v1549, %v1547
          %v1568 = vpack.c.b16 %v1550, %v1548
          %v1569 = vpack.c.b16 %v1553, %v1551
          %v1570 = vpack.c.b16 %v1554, %v1552
          %1587 = vmatpush.bf16.msra.mxu0 %v1569
          %1588 = vmatpush.bf16.msra.mxu0 %v1567
          %1589 = vmatpush.bf16.msra.mxu0 %v1565
          %1590 = vmatpush.bf16.msra.mxu0 %v1563
          %1591 = vmatpush.bf16.msra.mxu0 %v1561
          %1592 = vmatpush.bf16.msra.mxu0 %v1559
          %1593 = vmatpush.bf16.msra.mxu0 %v1557
          %1594 = vmatpush.bf16.msra.mxu0 %v1555
          %1595 = vmatmul.bf16.gmra.mxu0 %v1481
          %v1596 = vpop.f32.mrf.mxu0
          %v1597 = vadd.f32 0.0, %v1596
          %v1598 = vpop.f32.mrf.mxu0
          %v1599 = vadd.f32 0.0, %v1598
          %1600 = vmatmul.bf16.gmra.mxu0 %v1482
          %v1601 = vpop.f32.mrf.mxu0
          %v1602 = vadd.f32 0.0, %v1601
          %v1603 = vpop.f32.mrf.mxu0
          %v1604 = vadd.f32 0.0, %v1603
          %1605 = vmatmul.bf16.gmra.mxu0 %v1483
          %v1606 = vpop.f32.mrf.mxu0
          %v1607 = vadd.f32 0.0, %v1606
          %v1608 = vpop.f32.mrf.mxu0
          %v1609 = vadd.f32 0.0, %v1608
          %1610 = vmatmul.bf16.gmra.mxu0 %v1484
          %v1611 = vpop.f32.mrf.mxu0
          %v1612 = vadd.f32 0.0, %v1611
          %v1613 = vpop.f32.mrf.mxu0
          %v1614 = vadd.f32 0.0, %v1613
          %1615 = vmatmul.bf16.gmra.mxu0 %v1485
          %v1616 = vpop.f32.mrf.mxu0
          %v1617 = vadd.f32 0.0, %v1616
          %v1618 = vpop.f32.mrf.mxu0
          %v1619 = vadd.f32 0.0, %v1618
          %1620 = vmatmul.bf16.gmra.mxu0 %v1486
          %v1621 = vpop.f32.mrf.mxu0
          %v1622 = vadd.f32 0.0, %v1621
          %v1623 = vpop.f32.mrf.mxu0
          %v1624 = vadd.f32 0.0, %v1623
          %1625 = vmatmul.bf16.gmra.mxu0 %v1487
          %v1626 = vpop.f32.mrf.mxu0
          %v1627 = vadd.f32 0.0, %v1626
          %v1628 = vpop.f32.mrf.mxu0
          %v1629 = vadd.f32 0.0, %v1628
          %1630 = vmatmul.bf16.gmra.mxu0 %v1488
          %v1631 = vpop.f32.mrf.mxu0
          %v1632 = vadd.f32 0.0, %v1631
          %v1633 = vpop.f32.mrf.mxu0
          %v1634 = vadd.f32 0.0, %v1633
          %1635 = vmatmul.bf16.gmra.mxu0 %v1489
          %v1636 = vpop.f32.mrf.mxu0
          %v1637 = vadd.f32 0.0, %v1636
          %v1638 = vpop.f32.mrf.mxu0
          %v1639 = vadd.f32 0.0, %v1638
          %1640 = vmatmul.bf16.gmra.mxu0 %v1490
          %v1641 = vpop.f32.mrf.mxu0
          %v1642 = vadd.f32 0.0, %v1641
          %v1643 = vpop.f32.mrf.mxu0
          %v1644 = vadd.f32 0.0, %v1643
          %1645 = vdwg.mxu0
          %1646 = vmatpush.bf16.msra.mxu0 %v1570
          %1647 = vmatpush.bf16.msra.mxu0 %v1568
          %1648 = vmatpush.bf16.msra.mxu0 %v1566
          %1649 = vmatpush.bf16.msra.mxu0 %v1564
          %1650 = vmatpush.bf16.msra.mxu0 %v1562
          %1651 = vmatpush.bf16.msra.mxu0 %v1560
          %1652 = vmatpush.bf16.msra.mxu0 %v1558
          %1653 = vmatpush.bf16.msra.mxu0 %v1556
          %1654 = vmatmul.bf16.gmra.mxu0 %v1481
          %v1655 = vpop.f32.mrf.mxu0
          %v1656 = vadd.f32 0.0, %v1655
          %v1657 = vpop.f32.mrf.mxu0
          %v1658 = vadd.f32 0.0, %v1657
          %1659 = vmatmul.bf16.gmra.mxu0 %v1482
          %v1660 = vpop.f32.mrf.mxu0
          %v1661 = vadd.f32 0.0, %v1660
          %v1662 = vpop.f32.mrf.mxu0
          %v1663 = vadd.f32 0.0, %v1662
          %1664 = vmatmul.bf16.gmra.mxu0 %v1483
          %v1665 = vpop.f32.mrf.mxu0
          %v1666 = vadd.f32 0.0, %v1665
          %v1667 = vpop.f32.mrf.mxu0
          %v1668 = vadd.f32 0.0, %v1667
          %1669 = vmatmul.bf16.gmra.mxu0 %v1484
          %v1670 = vpop.f32.mrf.mxu0
          %v1671 = vadd.f32 0.0, %v1670
          %v1672 = vpop.f32.mrf.mxu0
          %v1673 = vadd.f32 0.0, %v1672
          %1674 = vmatmul.bf16.gmra.mxu0 %v1485
          %v1675 = vpop.f32.mrf.mxu0
          %v1676 = vadd.f32 0.0, %v1675
          %v1677 = vpop.f32.mrf.mxu0
          %v1678 = vadd.f32 0.0, %v1677
          %1679 = vmatmul.bf16.gmra.mxu0 %v1486
          %v1680 = vpop.f32.mrf.mxu0
          %v1681 = vadd.f32 0.0, %v1680
          %v1682 = vpop.f32.mrf.mxu0
          %v1683 = vadd.f32 0.0, %v1682
          %1684 = vmatmul.bf16.gmra.mxu0 %v1487
          %v1685 = vpop.f32.mrf.mxu0
          %v1686 = vadd.f32 0.0, %v1685
          %v1687 = vpop.f32.mrf.mxu0
          %v1688 = vadd.f32 0.0, %v1687
          %1689 = vmatmul.bf16.gmra.mxu0 %v1488
          %v1690 = vpop.f32.mrf.mxu0
          %v1691 = vadd.f32 0.0, %v1690
          %v1692 = vpop.f32.mrf.mxu0
          %v1693 = vadd.f32 0.0, %v1692
          %1694 = vmatmul.bf16.gmra.mxu0 %v1489
          %v1695 = vpop.f32.mrf.mxu0
          %v1696 = vadd.f32 0.0, %v1695
          %v1697 = vpop.f32.mrf.mxu0
          %v1698 = vadd.f32 0.0, %v1697
          %1699 = vmatmul.bf16.gmra.mxu0 %v1490
          %v1700 = vpop.f32.mrf.mxu0
          %v1701 = vadd.f32 0.0, %v1700
          %v1702 = vpop.f32.mrf.mxu0
          %v1703 = vadd.f32 0.0, %v1702
          %1704 = vdwg.mxu0
          %v1705 = vld [vmem:[%s436] sm:$0xff]
          %v1706 = vld [vmem:[%s436 + $0x8] sm:$0xff]
          %v1707 = vld [vmem:[%s436 + $0x10] sm:$0xff]
          %v1708 = vld [vmem:[%s436 + $0x18] sm:$0xff]
          %v1709 = vld [vmem:[%s436 + $0x20] sm:$0xff]
          %v1710 = vld [vmem:[%s436 + $0x28] sm:$0xff]
          %v1711 = vld [vmem:[%s436 + $0x30] sm:$0xff]
          %v1712 = vld [vmem:[%s436 + $0x38] sm:$0xff]
          %v1713 = vld [vmem:[%s436 + $0x40] sm:$0xff]
          %v1714 = vld [vmem:[%s436 + $0x48] sm:$0xff]
          %v1715 = vld [vmem:[%s436 + $0x50] sm:$0xff]
          %v1716 = vld [vmem:[%s436 + $0x58] sm:$0xff]
          %v1717 = vld [vmem:[%s436 + $0x60] sm:$0xff]
          %v1718 = vld [vmem:[%s436 + $0x68] sm:$0xff]
          %v1719 = vld [vmem:[%s436 + $0x70] sm:$0xff]
          %v1720 = vld [vmem:[%s436 + $0x78] sm:$0xff]
          %v1721 = vld [vmem:[%s436 + $0x80] sm:$0xff]
          %v1722 = vld [vmem:[%s436 + $0x88] sm:$0xff]
          %v1723 = vld [vmem:[%s436 + $0x90] sm:$0xff]
          %v1724 = vld [vmem:[%s436 + $0x98] sm:$0xff]
          %1726 = vset.pattern.permute.xlu0 0
          %1727 = vperm.xlu0 %1726, %v1705
          %v1728 = vpop.permute.xlu0 %1727
          %1731 = vset.pattern.permute.xlu0 0
          %1732 = vperm.xlu0 %1731, %v1706
          %v1733 = vpop.permute.xlu0 %1732
          %1736 = vset.pattern.permute.xlu0 0
          %1737 = vperm.xlu0 %1736, %v1707
          %v1738 = vpop.permute.xlu0 %1737
          %1741 = vset.pattern.permute.xlu0 0
          %1742 = vperm.xlu0 %1741, %v1708
          %v1743 = vpop.permute.xlu0 %1742
          %1746 = vset.pattern.permute.xlu0 0
          %1747 = vperm.xlu0 %1746, %v1709
          %v1748 = vpop.permute.xlu0 %1747
          %1751 = vset.pattern.permute.xlu0 0
          %1752 = vperm.xlu0 %1751, %v1710
          %v1753 = vpop.permute.xlu0 %1752
          %1756 = vset.pattern.permute.xlu0 0
          %1757 = vperm.xlu0 %1756, %v1711
          %v1758 = vpop.permute.xlu0 %1757
          %1761 = vset.pattern.permute.xlu0 0
          %1762 = vperm.xlu0 %1761, %v1712
          %v1763 = vpop.permute.xlu0 %1762
          %1766 = vset.pattern.permute.xlu0 0
          %1767 = vperm.xlu0 %1766, %v1713
          %v1768 = vpop.permute.xlu0 %1767
          %1771 = vset.pattern.permute.xlu0 0
          %1772 = vperm.xlu0 %1771, %v1714
          %v1773 = vpop.permute.xlu0 %1772
          %1776 = vset.pattern.permute.xlu0 0
          %1777 = vperm.xlu0 %1776, %v1715
          %v1778 = vpop.permute.xlu0 %1777
          %1781 = vset.pattern.permute.xlu0 0
          %1782 = vperm.xlu0 %1781, %v1716
          %v1783 = vpop.permute.xlu0 %1782
          %1786 = vset.pattern.permute.xlu0 0
          %1787 = vperm.xlu0 %1786, %v1717
          %v1788 = vpop.permute.xlu0 %1787
          %1791 = vset.pattern.permute.xlu0 0
          %1792 = vperm.xlu0 %1791, %v1718
          %v1793 = vpop.permute.xlu0 %1792
          %1796 = vset.pattern.permute.xlu0 0
          %1797 = vperm.xlu0 %1796, %v1719
          %v1798 = vpop.permute.xlu0 %1797
          %1801 = vset.pattern.permute.xlu0 0
          %1802 = vperm.xlu0 %1801, %v1720
          %v1803 = vpop.permute.xlu0 %1802
          %1806 = vset.pattern.permute.xlu0 0
          %1807 = vperm.xlu0 %1806, %v1721
          %v1808 = vpop.permute.xlu0 %1807
          %1811 = vset.pattern.permute.xlu0 0
          %1812 = vperm.xlu0 %1811, %v1722
          %v1813 = vpop.permute.xlu0 %1812
          %1816 = vset.pattern.permute.xlu0 0
          %1817 = vperm.xlu0 %1816, %v1723
          %v1818 = vpop.permute.xlu0 %1817
          %1821 = vset.pattern.permute.xlu0 0
          %1822 = vperm.xlu0 %1821, %v1724
          %v1823 = vpop.permute.xlu0 %1822
          %v1825 = vmul.f32 %v1597, %v1728
          %v1826 = vmul.f32 %v1656, %v1728
          %v1827 = vmul.f32 %v1599, %v1733
          %v1828 = vmul.f32 %v1658, %v1733
          %v1829 = vmul.f32 %v1602, %v1738
          %v1830 = vmul.f32 %v1661, %v1738
          %v1831 = vmul.f32 %v1604, %v1743
          %v1832 = vmul.f32 %v1663, %v1743
          %v1833 = vmul.f32 %v1607, %v1748
          %v1834 = vmul.f32 %v1666, %v1748
          %v1835 = vmul.f32 %v1609, %v1753
          %v1836 = vmul.f32 %v1668, %v1753
          %v1837 = vmul.f32 %v1612, %v1758
          %v1838 = vmul.f32 %v1671, %v1758
          %v1839 = vmul.f32 %v1614, %v1763
          %v1840 = vmul.f32 %v1673, %v1763
          %v1841 = vmul.f32 %v1617, %v1768
          %v1842 = vmul.f32 %v1676, %v1768
          %v1843 = vmul.f32 %v1619, %v1773
          %v1844 = vmul.f32 %v1678, %v1773
          %v1845 = vmul.f32 %v1622, %v1778
          %v1846 = vmul.f32 %v1681, %v1778
          %v1847 = vmul.f32 %v1624, %v1783
          %v1848 = vmul.f32 %v1683, %v1783
          %v1849 = vmul.f32 %v1627, %v1788
          %v1850 = vmul.f32 %v1686, %v1788
          %v1851 = vmul.f32 %v1629, %v1793
          %v1852 = vmul.f32 %v1688, %v1793
          %v1853 = vmul.f32 %v1632, %v1798
          %v1854 = vmul.f32 %v1691, %v1798
          %v1855 = vmul.f32 %v1634, %v1803
          %v1856 = vmul.f32 %v1693, %v1803
          %v1857 = vmul.f32 %v1637, %v1808
          %v1858 = vmul.f32 %v1696, %v1808
          %v1859 = vmul.f32 %v1639, %v1813
          %v1860 = vmul.f32 %v1698, %v1813
          %v1861 = vmul.f32 %v1642, %v1818
          %v1862 = vmul.f32 %v1701, %v1818
          %v1863 = vmul.f32 %v1644, %v1823
          %v1864 = vmul.f32 %v1703, %v1823
          %v1865 = vld [vmem:[%s366] sm:$0xf]
          %v1866 = vld [vmem:[%s366 + $0x4] sm:$0xf]
          %v1867 = vld [vmem:[%s366 + $0x8] sm:$0xf]
          %v1868 = vld [vmem:[%s366 + $0xc] sm:$0xf]
          %v1869 = vld [vmem:[%s366 + $0x10] sm:$0xf]
          %v1870 = vld [vmem:[%s366 + $0x14] sm:$0xf]
          %v1871 = vld [vmem:[%s366 + $0x18] sm:$0xf]
          %v1872 = vld [vmem:[%s366 + $0x1c] sm:$0xf]
          %v1873 = vld [vmem:[%s366 + $0x20] sm:$0xf]
          %v1874 = vld [vmem:[%s366 + $0x24] sm:$0xf]
          %v1875 = vld [vmem:[%s366 + $0x28] sm:$0xf]
          %v1876 = vld [vmem:[%s366 + $0x2c] sm:$0xf]
          %v1877 = vld [vmem:[%s366 + $0x30] sm:$0xf]
          %v1878 = vld [vmem:[%s366 + $0x34] sm:$0xf]
          %v1879 = vld [vmem:[%s366 + $0x38] sm:$0xf]
          %v1880 = vld [vmem:[%s366 + $0x3c] sm:$0xf]
          %v1881 = vld [vmem:[%s366 + $0x40] sm:$0xf]
          %v1882 = vld [vmem:[%s366 + $0x44] sm:$0xf]
          %v1883 = vld [vmem:[%s366 + $0x48] sm:$0xf]
          %v1884 = vld [vmem:[%s366 + $0x4c] sm:$0xf]
          %v1885 = vld [vmem:[#allocation9] sm:$0xff]
          %v1886 = vld [vmem:[#allocation9 + $0x8] sm:$0xff]
          %v1887 = vld [vmem:[#allocation9 + $0x10] sm:$0xff]
          %v1888 = vld [vmem:[#allocation9 + $0x18] sm:$0xff]
          %v1889 = vld [vmem:[#allocation9 + $0x20] sm:$0xff]
          %v1890 = vld [vmem:[#allocation9 + $0x28] sm:$0xff]
          %v1891 = vld [vmem:[#allocation9 + $0x30] sm:$0xff]
          %v1892 = vld [vmem:[#allocation9 + $0x38] sm:$0xff]
          %v1893 = vld [vmem:[#allocation9 + $0x40] sm:$0xff]
          %v1894 = vld [vmem:[#allocation9 + $0x48] sm:$0xff]
          %v1895 = vld [vmem:[#allocation9 + $0x50] sm:$0xff]
          %v1896 = vld [vmem:[#allocation9 + $0x58] sm:$0xff]
          %v1897 = vld [vmem:[#allocation9 + $0x60] sm:$0xff]
          %v1898 = vld [vmem:[#allocation9 + $0x68] sm:$0xff]
          %v1899 = vld [vmem:[#allocation9 + $0x70] sm:$0xff]
          %v1900 = vld [vmem:[#allocation9 + $0x78] sm:$0xff]
          %v1921 = vunpack.c.l.b16 %v1865
          %v1922 = vunpack.c.l.b16 %v1866
          %v1923 = vunpack.c.l.b16 %v1867
          %v1924 = vunpack.c.l.b16 %v1868
          %v1925 = vunpack.c.l.b16 %v1869
          %v1926 = vunpack.c.l.b16 %v1870
          %v1927 = vunpack.c.l.b16 %v1871
          %v1928 = vunpack.c.l.b16 %v1872
          %v1929 = vunpack.c.l.b16 %v1873
          %v1930 = vunpack.c.l.b16 %v1874
          %v1931 = vunpack.c.l.b16 %v1875
          %v1932 = vunpack.c.l.b16 %v1876
          %v1933 = vunpack.c.l.b16 %v1877
          %v1934 = vunpack.c.l.b16 %v1878
          %v1935 = vunpack.c.l.b16 %v1879
          %v1936 = vunpack.c.l.b16 %v1880
          %v1937 = vunpack.c.l.b16 %v1881
          %v1938 = vunpack.c.l.b16 %v1882
          %v1939 = vunpack.c.l.b16 %v1883
          %v1940 = vunpack.c.l.b16 %v1884
          %v1941 = vpack.c.b16 %v1922, %v1921
          %v1942 = vpack.c.b16 %v1924, %v1923
          %v1943 = vpack.c.b16 %v1926, %v1925
          %v1944 = vpack.c.b16 %v1928, %v1927
          %v1945 = vpack.c.b16 %v1930, %v1929
          %v1946 = vpack.c.b16 %v1932, %v1931
          %v1947 = vpack.c.b16 %v1934, %v1933
          %v1948 = vpack.c.b16 %v1936, %v1935
          %v1949 = vpack.c.b16 %v1938, %v1937
          %v1950 = vpack.c.b16 %v1940, %v1939
          %v1977 = vunpack.c.l.b16 %v1885
          %v1978 = vunpack.c.h.b16 %v1885
          %v1979 = vunpack.c.l.b16 %v1886
          %v1980 = vunpack.c.h.b16 %v1886
          %v1981 = vunpack.c.l.b16 %v1887
          %v1982 = vunpack.c.h.b16 %v1887
          %v1983 = vunpack.c.l.b16 %v1888
          %v1984 = vunpack.c.h.b16 %v1888
          %v1985 = vunpack.c.l.b16 %v1889
          %v1986 = vunpack.c.h.b16 %v1889
          %v1987 = vunpack.c.l.b16 %v1890
          %v1988 = vunpack.c.h.b16 %v1890
          %v1989 = vunpack.c.l.b16 %v1891
          %v1990 = vunpack.c.h.b16 %v1891
          %v1991 = vunpack.c.l.b16 %v1892
          %v1992 = vunpack.c.h.b16 %v1892
          %v1993 = vunpack.c.l.b16 %v1893
          %v1994 = vunpack.c.h.b16 %v1893
          %v1995 = vunpack.c.l.b16 %v1894
          %v1996 = vunpack.c.h.b16 %v1894
          %v1997 = vunpack.c.l.b16 %v1895
          %v1998 = vunpack.c.h.b16 %v1895
          %v1999 = vunpack.c.l.b16 %v1896
          %v2000 = vunpack.c.h.b16 %v1896
          %v2001 = vunpack.c.l.b16 %v1897
          %v2002 = vunpack.c.h.b16 %v1897
          %v2003 = vunpack.c.l.b16 %v1898
          %v2004 = vunpack.c.h.b16 %v1898
          %v2005 = vunpack.c.l.b16 %v1899
          %v2006 = vunpack.c.h.b16 %v1899
          %v2007 = vunpack.c.l.b16 %v1900
          %v2008 = vunpack.c.h.b16 %v1900
          %v2009 = vpack.c.b16 %v1979, %v1977
          %v2010 = vpack.c.b16 %v1980, %v1978
          %v2011 = vpack.c.b16 %v1983, %v1981
          %v2012 = vpack.c.b16 %v1984, %v1982
          %v2013 = vpack.c.b16 %v1987, %v1985
          %v2014 = vpack.c.b16 %v1988, %v1986
          %v2015 = vpack.c.b16 %v1991, %v1989
          %v2016 = vpack.c.b16 %v1992, %v1990
          %v2017 = vpack.c.b16 %v1995, %v1993
          %v2018 = vpack.c.b16 %v1996, %v1994
          %v2019 = vpack.c.b16 %v1999, %v1997
          %v2020 = vpack.c.b16 %v2000, %v1998
          %v2021 = vpack.c.b16 %v2003, %v2001
          %v2022 = vpack.c.b16 %v2004, %v2002
          %v2023 = vpack.c.b16 %v2007, %v2005
          %v2024 = vpack.c.b16 %v2008, %v2006
          %2041 = vmatpush.bf16.msra.mxu0 %v2023
          %2042 = vmatpush.bf16.msra.mxu0 %v2021
          %2043 = vmatpush.bf16.msra.mxu0 %v2019
          %2044 = vmatpush.bf16.msra.mxu0 %v2017
          %2045 = vmatpush.bf16.msra.mxu0 %v2015
          %2046 = vmatpush.bf16.msra.mxu0 %v2013
          %2047 = vmatpush.bf16.msra.mxu0 %v2011
          %2048 = vmatpush.bf16.msra.mxu0 %v2009
          %2049 = vmatmul.bf16.gmra.mxu0 %v1941
          %v2050 = vpop.f32.mrf.mxu0
          %v2051 = vadd.f32 0.0, %v2050
          %v2052 = vpop.f32.mrf.mxu0
          %v2053 = vadd.f32 0.0, %v2052
          %2054 = vmatmul.bf16.gmra.mxu0 %v1942
          %v2055 = vpop.f32.mrf.mxu0
          %v2056 = vadd.f32 0.0, %v2055
          %v2057 = vpop.f32.mrf.mxu0
          %v2058 = vadd.f32 0.0, %v2057
          %2059 = vmatmul.bf16.gmra.mxu0 %v1943
          %v2060 = vpop.f32.mrf.mxu0
          %v2061 = vadd.f32 0.0, %v2060
          %v2062 = vpop.f32.mrf.mxu0
          %v2063 = vadd.f32 0.0, %v2062
          %2064 = vmatmul.bf16.gmra.mxu0 %v1944
          %v2065 = vpop.f32.mrf.mxu0
          %v2066 = vadd.f32 0.0, %v2065
          %v2067 = vpop.f32.mrf.mxu0
          %v2068 = vadd.f32 0.0, %v2067
          %2069 = vmatmul.bf16.gmra.mxu0 %v1945
          %v2070 = vpop.f32.mrf.mxu0
          %v2071 = vadd.f32 0.0, %v2070
          %v2072 = vpop.f32.mrf.mxu0
          %v2073 = vadd.f32 0.0, %v2072
          %2074 = vmatmul.bf16.gmra.mxu0 %v1946
          %v2075 = vpop.f32.mrf.mxu0
          %v2076 = vadd.f32 0.0, %v2075
          %v2077 = vpop.f32.mrf.mxu0
          %v2078 = vadd.f32 0.0, %v2077
          %2079 = vmatmul.bf16.gmra.mxu0 %v1947
          %v2080 = vpop.f32.mrf.mxu0
          %v2081 = vadd.f32 0.0, %v2080
          %v2082 = vpop.f32.mrf.mxu0
          %v2083 = vadd.f32 0.0, %v2082
          %2084 = vmatmul.bf16.gmra.mxu0 %v1948
          %v2085 = vpop.f32.mrf.mxu0
          %v2086 = vadd.f32 0.0, %v2085
          %v2087 = vpop.f32.mrf.mxu0
          %v2088 = vadd.f32 0.0, %v2087
          %2089 = vmatmul.bf16.gmra.mxu0 %v1949
          %v2090 = vpop.f32.mrf.mxu0
          %v2091 = vadd.f32 0.0, %v2090
          %v2092 = vpop.f32.mrf.mxu0
          %v2093 = vadd.f32 0.0, %v2092
          %2094 = vmatmul.bf16.gmra.mxu0 %v1950
          %v2095 = vpop.f32.mrf.mxu0
          %v2096 = vadd.f32 0.0, %v2095
          %v2097 = vpop.f32.mrf.mxu0
          %v2098 = vadd.f32 0.0, %v2097
          %2099 = vdwg.mxu0
          %2100 = vmatpush.bf16.msra.mxu0 %v2024
          %2101 = vmatpush.bf16.msra.mxu0 %v2022
          %2102 = vmatpush.bf16.msra.mxu0 %v2020
          %2103 = vmatpush.bf16.msra.mxu0 %v2018
          %2104 = vmatpush.bf16.msra.mxu0 %v2016
          %2105 = vmatpush.bf16.msra.mxu0 %v2014
          %2106 = vmatpush.bf16.msra.mxu0 %v2012
          %2107 = vmatpush.bf16.msra.mxu0 %v2010
          %2108 = vmatmul.bf16.gmra.mxu0 %v1941
          %v2109 = vpop.f32.mrf.mxu0
          %v2110 = vadd.f32 0.0, %v2109
          %v2111 = vpop.f32.mrf.mxu0
          %v2112 = vadd.f32 0.0, %v2111
          %2113 = vmatmul.bf16.gmra.mxu0 %v1942
          %v2114 = vpop.f32.mrf.mxu0
          %v2115 = vadd.f32 0.0, %v2114
          %v2116 = vpop.f32.mrf.mxu0
          %v2117 = vadd.f32 0.0, %v2116
          %2118 = vmatmul.bf16.gmra.mxu0 %v1943
          %v2119 = vpop.f32.mrf.mxu0
          %v2120 = vadd.f32 0.0, %v2119
          %v2121 = vpop.f32.mrf.mxu0
          %v2122 = vadd.f32 0.0, %v2121
          %2123 = vmatmul.bf16.gmra.mxu0 %v1944
          %v2124 = vpop.f32.mrf.mxu0
          %v2125 = vadd.f32 0.0, %v2124
          %v2126 = vpop.f32.mrf.mxu0
          %v2127 = vadd.f32 0.0, %v2126
          %2128 = vmatmul.bf16.gmra.mxu0 %v1945
          %v2129 = vpop.f32.mrf.mxu0
          %v2130 = vadd.f32 0.0, %v2129
          %v2131 = vpop.f32.mrf.mxu0
          %v2132 = vadd.f32 0.0, %v2131
          %2133 = vmatmul.bf16.gmra.mxu0 %v1946
          %v2134 = vpop.f32.mrf.mxu0
          %v2135 = vadd.f32 0.0, %v2134
          %v2136 = vpop.f32.mrf.mxu0
          %v2137 = vadd.f32 0.0, %v2136
          %2138 = vmatmul.bf16.gmra.mxu0 %v1947
          %v2139 = vpop.f32.mrf.mxu0
          %v2140 = vadd.f32 0.0, %v2139
          %v2141 = vpop.f32.mrf.mxu0
          %v2142 = vadd.f32 0.0, %v2141
          %2143 = vmatmul.bf16.gmra.mxu0 %v1948
          %v2144 = vpop.f32.mrf.mxu0
          %v2145 = vadd.f32 0.0, %v2144
          %v2146 = vpop.f32.mrf.mxu0
          %v2147 = vadd.f32 0.0, %v2146
          %2148 = vmatmul.bf16.gmra.mxu0 %v1949
          %v2149 = vpop.f32.mrf.mxu0
          %v2150 = vadd.f32 0.0, %v2149
          %v2151 = vpop.f32.mrf.mxu0
          %v2152 = vadd.f32 0.0, %v2151
          %2153 = vmatmul.bf16.gmra.mxu0 %v1950
          %v2154 = vpop.f32.mrf.mxu0
          %v2155 = vadd.f32 0.0, %v2154
          %v2156 = vpop.f32.mrf.mxu0
          %v2157 = vadd.f32 0.0, %v2156
          %2158 = vdwg.mxu0
          %v2159 = vadd.f32 %v1825, %v2051
          %v2160 = vadd.f32 %v1826, %v2110
          %v2161 = vadd.f32 %v1827, %v2053
          %v2162 = vadd.f32 %v1828, %v2112
          %v2163 = vadd.f32 %v1829, %v2056
          %v2164 = vadd.f32 %v1830, %v2115
          %v2165 = vadd.f32 %v1831, %v2058
          %v2166 = vadd.f32 %v1832, %v2117
          %v2167 = vadd.f32 %v1833, %v2061
          %v2168 = vadd.f32 %v1834, %v2120
          %v2169 = vadd.f32 %v1835, %v2063
          %v2170 = vadd.f32 %v1836, %v2122
          %v2171 = vadd.f32 %v1837, %v2066
          %v2172 = vadd.f32 %v1838, %v2125
          %v2173 = vadd.f32 %v1839, %v2068
          %v2174 = vadd.f32 %v1840, %v2127
          %v2175 = vadd.f32 %v1841, %v2071
          %v2176 = vadd.f32 %v1842, %v2130
          %v2177 = vadd.f32 %v1843, %v2073
          %v2178 = vadd.f32 %v1844, %v2132
          %v2179 = vadd.f32 %v1845, %v2076
          %v2180 = vadd.f32 %v1846, %v2135
          %v2181 = vadd.f32 %v1847, %v2078
          %v2182 = vadd.f32 %v1848, %v2137
          %v2183 = vadd.f32 %v1849, %v2081
          %v2184 = vadd.f32 %v1850, %v2140
          %v2185 = vadd.f32 %v1851, %v2083
          %v2186 = vadd.f32 %v1852, %v2142
          %v2187 = vadd.f32 %v1853, %v2086
          %v2188 = vadd.f32 %v1854, %v2145
          %v2189 = vadd.f32 %v1855, %v2088
          %v2190 = vadd.f32 %v1856, %v2147
          %v2191 = vadd.f32 %v1857, %v2091
          %v2192 = vadd.f32 %v1858, %v2150
          %v2193 = vadd.f32 %v1859, %v2093
          %v2194 = vadd.f32 %v1860, %v2152
          %v2195 = vadd.f32 %v1861, %v2096
          %v2196 = vadd.f32 %v1862, %v2155
          %v2197 = vadd.f32 %v1863, %v2098
          %v2198 = vadd.f32 %v1864, %v2157
          %v2199 = vld [vmem:[%s6] sm:$0x3]
          %v2201 = vperm.slane %v2199, 0
          %v2202 = vperm.slane %v2199, 1
          %v2205 = vadd.f32 %v2159, %v2201
          %v2206 = vadd.f32 %v2160, %v2202
          %v2207 = vadd.f32 %v2161, %v2201
          %v2208 = vadd.f32 %v2162, %v2202
          %v2209 = vadd.f32 %v2163, %v2201
          %v2210 = vadd.f32 %v2164, %v2202
          %v2211 = vadd.f32 %v2165, %v2201
          %v2212 = vadd.f32 %v2166, %v2202
          %v2213 = vadd.f32 %v2167, %v2201
          %v2214 = vadd.f32 %v2168, %v2202
          %v2215 = vadd.f32 %v2169, %v2201
          %v2216 = vadd.f32 %v2170, %v2202
          %v2217 = vadd.f32 %v2171, %v2201
          %v2218 = vadd.f32 %v2172, %v2202
          %v2219 = vadd.f32 %v2173, %v2201
          %v2220 = vadd.f32 %v2174, %v2202
          %v2221 = vadd.f32 %v2175, %v2201
          %v2222 = vadd.f32 %v2176, %v2202
          %v2223 = vadd.f32 %v2177, %v2201
          %v2224 = vadd.f32 %v2178, %v2202
          %v2225 = vadd.f32 %v2179, %v2201
          %v2226 = vadd.f32 %v2180, %v2202
          %v2227 = vadd.f32 %v2181, %v2201
          %v2228 = vadd.f32 %v2182, %v2202
          %v2229 = vadd.f32 %v2183, %v2201
          %v2230 = vadd.f32 %v2184, %v2202
          %v2231 = vadd.f32 %v2185, %v2201
          %v2232 = vadd.f32 %v2186, %v2202
          %v2233 = vadd.f32 %v2187, %v2201
          %v2234 = vadd.f32 %v2188, %v2202
          %v2235 = vadd.f32 %v2189, %v2201
          %v2236 = vadd.f32 %v2190, %v2202
          %v2237 = vadd.f32 %v2191, %v2201
          %v2238 = vadd.f32 %v2192, %v2202
          %v2239 = vadd.f32 %v2193, %v2201
          %v2240 = vadd.f32 %v2194, %v2202
          %v2241 = vadd.f32 %v2195, %v2201
          %v2242 = vadd.f32 %v2196, %v2202
          %v2243 = vadd.f32 %v2197, %v2201
          %v2244 = vadd.f32 %v2198, %v2202
          %v2245 = vmax.f32 %v2205, 0.0
          %v2246 = vmax.f32 %v2206, 0.0
          %v2247 = vmax.f32 %v2207, 0.0
          %v2248 = vmax.f32 %v2208, 0.0
          %v2249 = vmax.f32 %v2209, 0.0
          %v2250 = vmax.f32 %v2210, 0.0
          %v2251 = vmax.f32 %v2211, 0.0
          %v2252 = vmax.f32 %v2212, 0.0
          %v2253 = vmax.f32 %v2213, 0.0
          %v2254 = vmax.f32 %v2214, 0.0
          %v2255 = vmax.f32 %v2215, 0.0
          %v2256 = vmax.f32 %v2216, 0.0
          %v2257 = vmax.f32 %v2217, 0.0
          %v2258 = vmax.f32 %v2218, 0.0
          %v2259 = vmax.f32 %v2219, 0.0
          %v2260 = vmax.f32 %v2220, 0.0
          %v2261 = vmax.f32 %v2221, 0.0
          %v2262 = vmax.f32 %v2222, 0.0
          %v2263 = vmax.f32 %v2223, 0.0
          %v2264 = vmax.f32 %v2224, 0.0
          %v2265 = vmax.f32 %v2225, 0.0
          %v2266 = vmax.f32 %v2226, 0.0
          %v2267 = vmax.f32 %v2227, 0.0
          %v2268 = vmax.f32 %v2228, 0.0
          %v2269 = vmax.f32 %v2229, 0.0
          %v2270 = vmax.f32 %v2230, 0.0
          %v2271 = vmax.f32 %v2231, 0.0
          %v2272 = vmax.f32 %v2232, 0.0
          %v2273 = vmax.f32 %v2233, 0.0
          %v2274 = vmax.f32 %v2234, 0.0
          %v2275 = vmax.f32 %v2235, 0.0
          %v2276 = vmax.f32 %v2236, 0.0
          %v2277 = vmax.f32 %v2237, 0.0
          %v2278 = vmax.f32 %v2238, 0.0
          %v2279 = vmax.f32 %v2239, 0.0
          %v2280 = vmax.f32 %v2240, 0.0
          %v2281 = vmax.f32 %v2241, 0.0
          %v2282 = vmax.f32 %v2242, 0.0
          %v2283 = vmax.f32 %v2243, 0.0
          %v2284 = vmax.f32 %v2244, 0.0
          %v2285 = vpack.c.bf16 %v2246, %v2245
          %v2286 = vpack.c.bf16 %v2248, %v2247
          %v2287 = vpack.c.bf16 %v2250, %v2249
          %v2288 = vpack.c.bf16 %v2252, %v2251
          %v2289 = vpack.c.bf16 %v2254, %v2253
          %v2290 = vpack.c.bf16 %v2256, %v2255
          %v2291 = vpack.c.bf16 %v2258, %v2257
          %v2292 = vpack.c.bf16 %v2260, %v2259
          %v2293 = vpack.c.bf16 %v2262, %v2261
          %v2294 = vpack.c.bf16 %v2264, %v2263
          %v2295 = vpack.c.bf16 %v2266, %v2265
          %v2296 = vpack.c.bf16 %v2268, %v2267
          %v2297 = vpack.c.bf16 %v2270, %v2269
          %v2298 = vpack.c.bf16 %v2272, %v2271
          %v2299 = vpack.c.bf16 %v2274, %v2273
          %v2300 = vpack.c.bf16 %v2276, %v2275
          %v2301 = vpack.c.bf16 %v2278, %v2277
          %v2302 = vpack.c.bf16 %v2280, %v2279
          %v2303 = vpack.c.bf16 %v2282, %v2281
          %v2304 = vpack.c.bf16 %v2284, %v2283
          %2305 = vst [vmem:[%s422] sm:$0xff] %v2285
          %2306 = vst [vmem:[%s422 + $0x8] sm:$0xff] %v2286
          %2307 = vst [vmem:[%s422 + $0x10] sm:$0xff] %v2287
          %2308 = vst [vmem:[%s422 + $0x18] sm:$0xff] %v2288
          %2309 = vst [vmem:[%s422 + $0x20] sm:$0xff] %v2289
          %2310 = vst [vmem:[%s422 + $0x28] sm:$0xff] %v2290
          %2311 = vst [vmem:[%s422 + $0x30] sm:$0xff] %v2291
          %2312 = vst [vmem:[%s422 + $0x38] sm:$0xff] %v2292
          %2313 = vst [vmem:[%s422 + $0x40] sm:$0xff] %v2293
          %2314 = vst [vmem:[%s422 + $0x48] sm:$0xff] %v2294
          %2315 = vst [vmem:[%s422 + $0x50] sm:$0xff] %v2295
          %2316 = vst [vmem:[%s422 + $0x58] sm:$0xff] %v2296
          %2317 = vst [vmem:[%s422 + $0x60] sm:$0xff] %v2297
          %2318 = vst [vmem:[%s422 + $0x68] sm:$0xff] %v2298
          %2319 = vst [vmem:[%s422 + $0x70] sm:$0xff] %v2299
          %2320 = vst [vmem:[%s422 + $0x78] sm:$0xff] %v2300
          %2321 = vst [vmem:[%s422 + $0x80] sm:$0xff] %v2301
          %2322 = vst [vmem:[%s422 + $0x88] sm:$0xff] %v2302
          %2323 = vst [vmem:[%s422 + $0x90] sm:$0xff] %v2303
          %2324 = vst [vmem:[%s422 + $0x98] sm:$0xff] %v2304
        $region72: #{tpu_custom_call.1} parent=47 // pred_fallthru
          _
        %s2325 = sand.u32 %s217, 1
        %s2326 = scalar_lea.sflag [#allocation5], %s2325
        %s2327 = sand.u32 %s217, 1
        %s2328 = smul.addr %s2327, 160
        %s2329 = scalar_lea.vmem [#allocation11], %s2328
        // Predicated region
        $region73: #{tpu_custom_call.1} parent=47 // pred_check
          %p2330 = pneg %p227
        $region74: #{tpu_custom_call.1} parent=47 // pred_check_branch
          %2332 = sbr.rel (%p2330) target = $region76
        $region75: #{tpu_custom_call.1} parent=47 // pred_region
          %s2333 = smul.u32 20, %s32
          %2335 = vsyncadd %s2326, 0
          %s2336 = smul.addr %s2333, 2
          %s2337 = smul.addr %s2336, 4
          %s2338 = scalar_lea.hbm %s7, %s2337
          %s2339 = sshll.u32 %s2329, 4
          %s2340 = int_to_ptr.vmem [resolvable:$true] %s2339
          %s2341 = sshll.u32 %s2338, 4
          %s2342 = int_to_ptr.hbm [resolvable:$true] %s2341
          %2347 = dma.vmem_to_hbm [thread:$0]  %s2340, 2560, %s2342, %s2326, 128, 128, 8
        $region76: #{tpu_custom_call.1} parent=47 // pred_fallthru
          _
      $region48: #{tpu_custom_call.1} parent=5 // pred_fallthru
        _
      %p2348 = scmp.le.s32.totalorder 2, %s23
      // Predicated region
      $region77: #{tpu_custom_call.1} parent=5 // pred_check
        %p2349 = pneg %p2348
      $region78: #{tpu_custom_call.1} parent=5 // pred_check_branch
        %2351 = sbr.rel (%p2349) target = $region80
      $region79: #{tpu_custom_call.1} parent=5 // pred_region
        %s2352 = ssub.s32 %s23, 2
        // Predicated region
        $region81: #{tpu_custom_call.1} parent=79 // pred_check
          %p2353 = pneg %p233
        $region82: #{tpu_custom_call.1} parent=79 // pred_check_branch
          %2355 = sbr.rel (%p2353) target = $region84
        $region83: #{tpu_custom_call.1} parent=79 // pred_region
          %s2356 = sand.u32 %s218, 1
          %s2357 = scalar_lea.sflag [#allocation5], %s2356
          %s2358 = sand.u32 %s218, 1
          %s2359 = smul.addr %s2358, 160
          %s2360 = scalar_lea.vmem [#allocation11], %s2359
          %2362 = dma.done %s2357, 2560
        $region84: #{tpu_custom_call.1} parent=79 // pred_fallthru
          _
      $region80: #{tpu_custom_call.1} parent=5 // pred_fallthru
        _
    $region6: #{tpu_custom_call.1} parent=1 // loop_footer
      %s27 = sadd.s32 1, %s23
    $region7: #{tpu_custom_call.1} parent=1 // loop_footer_branch
      %22 = sbr.rel target = $region3
    $region8: #{tpu_custom_call.1} parent=1 // loop_exit
      _
    %2363 = vsyncpa [#allocation4], 1
    %s2364 = scalar_lea.sflag [#allocation4], 1
    %2365 = vsyncpa %s2364, 1
    %2366 = vsyncpa [#allocation7], 1
    %s2367 = scalar_lea.sflag [#allocation7], 1
    %2368 = vsyncpa %s2367, 1
    %2369 = vsyncpa [#allocation10], 1
    %2370 = vsyncpa [#allocation5], 1
    %s2371 = scalar_lea.sflag [#allocation5], 1
    %2372 = vsyncpa %s2371, 1

</llo_original>
